<compile_context>
chip_gen: v7x
topology: tpu7x:2x2x1
jax: 0.10.0
libtpu: 0.0.40
codegen_flags: <defaults>
</compile_context>

<pallas_src>
import math

import jax
import jax.numpy as jnp
from jax.experimental import pallas as pl
from jax.experimental.pallas import tpu as pltpu


def _round_up(x, m):
    return ((x + m - 1) // m) * m


def _make_kernel(G, exp_dtype, mxu_dtype, approx_recip):
    """softmax(x1[g]) @ x2[g] for G packed heads; one lane-dense (TQ, G*D) store."""

    def kernel(x1_ref, x2_ref, o_ref):
        outs = []
        for g in range(G):                                   # static, G small
            s = x1_ref[g].astype(jnp.float32)                # (TQ, Sk) softmax math in f32
            m = jnp.max(s, axis=-1, keepdims=True)
            e = jnp.exp((s - m).astype(exp_dtype))           # bf16 exp on bf16 inputs (EUP)
            e = e.astype(mxu_dtype)                          # bf16 MXU operand
            denom = jnp.sum(e.astype(jnp.float32), axis=-1, keepdims=True)
            v = x2_ref[g].astype(mxu_dtype)
            acc = jnp.dot(e, v, preferred_element_type=jnp.float32)   # un-normalized
            # Normalize AFTER the matmul: (TQ, D) VPU multiply instead of (TQ, Sk).
            acc = acc * pl.reciprocal(denom, approx=approx_recip)
            outs.append(acc)
        out = outs[0] if G == 1 else jnp.concatenate(outs, axis=-1)   # (TQ, G*D) lane-dense
        o_ref[...] = out.astype(o_ref.dtype)

    return kernel


def _vmem_budget():
    """(per-step tile budget bytes, vmem_limit bytes) sized to this chip's VMEM."""
    try:
        cap = pltpu.get_tpu_info().vmem_capacity_bytes
    except Exception:
        cap = 128 << 20
    if cap <= (64 << 20):            # v7x-class: 64 MiB physical per TensorCore
        return 18 << 20, 52 << 20
    return 56 << 20, 96 << 20        # v5e / v6e: 128 MiB physical


def _choose_tq(Sq, Sk, D, G, e_x1, e_x2, e_out, x2_bufs, granule, max_tq, budget):
    """Largest Sq tile (multiple of `granule`) whose VMEM footprint fits the budget,
    counting the f32 softmax intermediates."""
    fixed = x2_bufs * G * Sk * D * e_x2              # resident x2 block(s)
    per_row = (2 * G * Sk * e_x1                     # double-buffered x1 tile
               + 2 * G * D * e_out                   # double-buffered out tile
               + 4 * Sk * 4)                         # f32 softmax intermediates (s, e, ...)
    avail = max(budget - fixed, granule * per_row)
    cap = max(granule, min(max_tq, avail // per_row))
    cap = (cap // granule) * granule
    return int(min(cap, _round_up(Sq, granule)))


def softmax_matmul_sparse(x1, x2, *, max_tq=2048, mxu_dtype=jnp.bfloat16):
    """out = softmax(x1, axis=-1) @ x2, batched over all leading dims."""
    assert x1.shape[:-2] == x2.shape[:-2], "leading (batch) dims must match"
    assert x1.shape[-1] == x2.shape[-2], "contraction dims must match"
    lead = x1.shape[:-2]
    Sq, Sk = x1.shape[-2], x1.shape[-1]
    D = x2.shape[-1]
    BH = int(math.prod(lead)) if lead else 1
    out_dtype = jnp.promote_types(x1.dtype, x2.dtype)

    # Pack G heads per grid step when D < 128 so the output block is lane-dense.
    G = 1
    if D < 128 and BH > 1:
        for g in range(min(128 // D, BH), 0, -1):
            if BH % g == 0:
                G = g
                break
    NG = BH // G
    GD = G * D

    e_x1 = jnp.dtype(x1.dtype).itemsize
    e_x2 = jnp.dtype(x2.dtype).itemsize
    e_out = jnp.dtype(out_dtype).itemsize

    budget, limit_cap = _vmem_budget()
    granule = max(8, 8 * max(1, 4 // e_x1))          # 8 rows f32, 16 bf16, 32 int8

    # x2 only changes at head-group boundaries; single-buffer it when large.
    x2_bufs = 2
    if 2 * G * Sk * D * e_x2 > budget // 3:
        x2_bufs = 1

    TQ = _choose_tq(Sq, Sk, D, G, e_x1, e_x2, e_out, x2_bufs, granule, max_tq, budget)
    Sq_pad = _round_up(Sq, TQ)
    n_q = Sq_pad // TQ

    x1f = x1.reshape(NG, G, Sq, Sk)
    x2f = x2.reshape(NG, G, Sk, D)
    if Sq_pad != Sq:
        # Zero rows softmax to a harmless uniform distribution; sliced off below.
        x1f = jnp.pad(x1f, ((0, 0), (0, 0), (0, Sq_pad - Sq), (0, 0)))

    exp_dtype = jnp.bfloat16 if x1.dtype == jnp.bfloat16 else jnp.float32
    approx_recip = jnp.dtype(out_dtype).itemsize < 4   # exact reciprocal for f32 outputs

    # Scoped-VMEM limit sized to the chosen tiles + f32 intermediates + headroom.
    vmem_est = (x2_bufs * G * Sk * D * e_x2
                + 2 * G * TQ * Sk * e_x1
                + 2 * TQ * GD * e_out
                + 4 * TQ * Sk * 4)
    vmem_limit = int(min(max(vmem_est + (8 << 20), 32 << 20), limit_cap))

    x1_spec = pl.BlockSpec((pl.Squeezed(), G, TQ, Sk), lambda i, q: (i, 0, q, 0))
    # index_map independent of q -> x2 block stays VMEM-resident across Sq tiles.
    if x2_bufs == 1:
        x2_spec = pl.BlockSpec((pl.Squeezed(), G, Sk, D), lambda i, q: (i, 0, 0, 0),
                               pipeline_mode=pl.Buffered(1))
    else:
        x2_spec = pl.BlockSpec((pl.Squeezed(), G, Sk, D), lambda i, q: (i, 0, 0, 0))
    out_spec = pl.BlockSpec((pl.Squeezed(), TQ, GD), lambda i, q: (i, q, 0))

    out = pl.pallas_call(
        _make_kernel(G, exp_dtype, mxu_dtype, approx_recip),
        out_shape=jax.ShapeDtypeStruct((NG, Sq_pad, GD), out_dtype),
        grid_spec=pltpu.PrefetchScalarGridSpec(
            num_scalar_prefetch=0,
            grid=(NG, n_q),
            in_specs=[x1_spec, x2_spec],
            out_specs=out_spec,
        ),
        compiler_params=pltpu.CompilerParams(
            dimension_semantics=("parallel", "parallel"),
            vmem_limit_bytes=vmem_limit,
        ),
    )(x1f, x2f)

    if Sq_pad != Sq:
        out = out[:, :Sq, :]
    if G > 1:
        # (NG, Sq, G*D) -> (NG, G, Sq, D): un-pack heads (layout plumbing only).
        out = out.reshape(NG, Sq, G, D).transpose(0, 2, 1, 3)
    return out.reshape(*lead, Sq, D) if lead else out.reshape(Sq, D)


if __name__ == "__main__":
    # Small, deterministic attention-style shapes.
    B, H, Sq, Sk, D = 2, 2, 256, 256, 64
    key = jax.random.PRNGKey(0)
    k1, k2 = jax.random.split(key)
    x1 = jax.random.normal(k1, (B, H, Sq, Sk), dtype=jnp.float32)
    x2 = jax.random.normal(k2, (B, H, Sk, D), dtype=jnp.float32)

    ref = jnp.matmul(jax.nn.softmax(x1, axis=-1), x2)

    # f32 inputs: head-packed lane-dense output (G=2 at D=64), bf16 MXU operands.
    out = jax.block_until_ready(softmax_matmul_sparse(x1, x2))
    assert out.shape == (B, H, Sq, D)
    assert jnp.allclose(out, ref, atol=1e-2, rtol=1e-2), "f32 mismatch vs reference"

    # Tiled-Sq path with a non-divisible Sq (exercises padding + multiple q tiles).
    Sq2 = 200
    x1s = x1[:, :, :Sq2, :]
    refs = jnp.matmul(jax.nn.softmax(x1s, axis=-1), x2)
    outs = jax.block_until_ready(softmax_matmul_sparse(x1s, x2, max_tq=64))
    assert outs.shape == (B, H, Sq2, D)
    assert jnp.allclose(outs, refs, atol=1e-2, rtol=1e-2), "tiled/padded mismatch"

    # bf16 fast path: bf16 exp (EUP), bf16 MXU operands, f32 accumulation.
    x1b = x1.astype(jnp.bfloat16)
    x2b = x2.astype(jnp.bfloat16)
    refb = jnp.matmul(jax.nn.softmax(x1b.astype(jnp.float32), axis=-1),
                      x2b.astype(jnp.float32))
    outb = jax.block_until_ready(softmax_matmul_sparse(x1b, x2b))
    assert jnp.allclose(outb.astype(jnp.float32), refb, atol=5e-2, rtol=5e-2), \
        "bf16 mismatch vs reference"

    print("KERNEL_OK")
</pallas_src>

<mosaic_0001>
module attributes {stable_mosaic.version = 11 : i64} {
  func.func @kernel(%arg0: i32, %arg1: i32, %arg2: memref<1x2x256x256xf32, #tpu.memory_space<vmem>>, %arg3: memref<1x2x256x64xf32, #tpu.memory_space<vmem>>, %arg4: memref<1x256x128xf32, #tpu.memory_space<vmem>>) attributes {dimension_semantics = [#tpu.dimension_semantics<parallel>, #tpu.dimension_semantics<parallel>], iteration_bounds = array<i64: 2, 1>, scalar_prefetch = 0 : i64, scratch_operands = 0 : i64, tpu.core_type = #tpu.core_type<tc>, window_params = [{transform_indices = @transform_0, window_bounds = array<i64: 1, 2, 256, 256>}, {transform_indices = @transform_1, window_bounds = array<i64: 1, 2, 256, 64>}, {transform_indices = @transform_2, window_bounds = array<i64: 1, 256, 128>}]} {
    %c0 = arith.constant 0 : index
    %c0_0 = arith.constant 0 : index
    %c0_1 = arith.constant 0 : index
    %c0_2 = arith.constant 0 : index
    %0 = vector.load %arg2[%c0, %c0_0, %c0_1, %c0_2] : memref<1x2x256x256xf32, #tpu.memory_space<vmem>>, vector<1x1x256x256xf32>
    %1 = vector.shape_cast %0 : vector<1x1x256x256xf32> to vector<256x256xf32>
    %cst = arith.constant dense<0xFF800000> : vector<256xf32>
    %2 = vector.multi_reduction <maximumf>, %1, %cst [1] : vector<256x256xf32> to vector<256xf32>
    %3 = vector.shape_cast %2 : vector<256xf32> to vector<256x1xf32>
    %4 = vector.broadcast %3 : vector<256x1xf32> to vector<256x256xf32>
    %5 = arith.subf %1, %4 : vector<256x256xf32>
    %6 = math.exp %5 : vector<256x256xf32>
    %7 = arith.truncf %6 : vector<256x256xf32> to vector<256x256xbf16>
    %8 = arith.extf %7 : vector<256x256xbf16> to vector<256x256xf32>
    %cst_3 = arith.constant dense<0.000000e+00> : vector<256xf32>
    %9 = vector.multi_reduction <add>, %8, %cst_3 [1] : vector<256x256xf32> to vector<256xf32>
    %10 = vector.shape_cast %9 : vector<256xf32> to vector<256x1xf32>
    %c0_4 = arith.constant 0 : index
    %c0_5 = arith.constant 0 : index
    %c0_6 = arith.constant 0 : index
    %c0_7 = arith.constant 0 : index
    %11 = vector.load %arg3[%c0_4, %c0_5, %c0_6, %c0_7] : memref<1x2x256x64xf32, #tpu.memory_space<vmem>>, vector<1x1x256x64xf32>
    %12 = vector.shape_cast %11 : vector<1x1x256x64xf32> to vector<256x64xf32>
    %13 = arith.truncf %12 : vector<256x64xf32> to vector<256x64xbf16>
    %cst_8 = arith.constant dense<0.000000e+00> : vector<256x64xf32>
    %14 = tpu.matmul %7, %13, %cst_8 {dimension_numbers = #tpu.dot_dimension_numbers<[1], [0], [0], [1], [0, 0, 1, 1], [], []>} : vector<256x256xbf16>, vector<256x64xbf16>, vector<256x64xf32> -> vector<256x64xf32>
    %15 = tpu.reciprocal %10 : vector<256x1xf32> -> vector<256x1xf32>
    %16 = vector.broadcast %15 : vector<256x1xf32> to vector<256x64xf32>
    %17 = arith.mulf %14, %16 : vector<256x64xf32>
    %c0_9 = arith.constant 0 : index
    %c1 = arith.constant 1 : index
    %c0_10 = arith.constant 0 : index
    %c0_11 = arith.constant 0 : index
    %18 = vector.load %arg2[%c0_9, %c1, %c0_10, %c0_11] : memref<1x2x256x256xf32, #tpu.memory_space<vmem>>, vector<1x1x256x256xf32>
    %19 = vector.shape_cast %18 : vector<1x1x256x256xf32> to vector<256x256xf32>
    %cst_12 = arith.constant dense<0xFF800000> : vector<256xf32>
    %20 = vector.multi_reduction <maximumf>, %19, %cst_12 [1] : vector<256x256xf32> to vector<256xf32>
    %21 = vector.shape_cast %20 : vector<256xf32> to vector<256x1xf32>
    %22 = vector.broadcast %21 : vector<256x1xf32> to vector<256x256xf32>
    %23 = arith.subf %19, %22 : vector<256x256xf32>
    %24 = math.exp %23 : vector<256x256xf32>
    %25 = arith.truncf %24 : vector<256x256xf32> to vector<256x256xbf16>
    %26 = arith.extf %25 : vector<256x256xbf16> to vector<256x256xf32>
    %cst_13 = arith.constant dense<0.000000e+00> : vector<256xf32>
    %27 = vector.multi_reduction <add>, %26, %cst_13 [1] : vector<256x256xf32> to vector<256xf32>
    %28 = vector.shape_cast %27 : vector<256xf32> to vector<256x1xf32>
    %c0_14 = arith.constant 0 : index
    %c1_15 = arith.constant 1 : index
    %c0_16 = arith.constant 0 : index
    %c0_17 = arith.constant 0 : index
    %29 = vector.load %arg3[%c0_14, %c1_15, %c0_16, %c0_17] : memref<1x2x256x64xf32, #tpu.memory_space<vmem>>, vector<1x1x256x64xf32>
    %30 = vector.shape_cast %29 : vector<1x1x256x64xf32> to vector<256x64xf32>
    %31 = arith.truncf %30 : vector<256x64xf32> to vector<256x64xbf16>
    %cst_18 = arith.constant dense<0.000000e+00> : vector<256x64xf32>
    %32 = tpu.matmul %25, %31, %cst_18 {dimension_numbers = #tpu.dot_dimension_numbers<[1], [0], [0], [1], [0, 0, 1, 1], [], []>} : vector<256x256xbf16>, vector<256x64xbf16>, vector<256x64xf32> -> vector<256x64xf32>
    %33 = tpu.reciprocal %28 : vector<256x1xf32> -> vector<256x1xf32>
    %34 = vector.broadcast %33 : vector<256x1xf32> to vector<256x64xf32>
    %35 = arith.mulf %32, %34 : vector<256x64xf32>
    %36 = tpu.concatenate %17, %35 in 1 : vector<256x64xf32>, vector<256x64xf32> -> vector<256x128xf32>
    %c0_19 = arith.constant 0 : index
    %c0_20 = arith.constant 0 : index
    %c0_21 = arith.constant 0 : index
    %37 = vector.load %arg4[%c0_19, %c0_20, %c0_21] : memref<1x256x128xf32, #tpu.memory_space<vmem>>, vector<1x256x128xf32>
    %38 = vector.shape_cast %37 : vector<1x256x128xf32> to vector<256x128xf32>
    %39 = vector.shape_cast %36 : vector<256x128xf32> to vector<1x256x128xf32>
    tpu.vector_store %arg4[%c0_19, %c0_20, %c0_21], %39 {strides = array<i32>} : memref<1x256x128xf32, #tpu.memory_space<vmem>>, vector<1x256x128xf32>,
    return
  }
  func.func @transform_0(%arg0: i32, %arg1: i32) -> (i32, i32, i32, i32) {
    %c0_i32 = arith.constant 0 : i32
    %c0_i32_0 = arith.constant 0 : i32
    %c0_i32_1 = arith.constant 0 : i32
    return %arg0, %c0_i32, %arg1, %c0_i32_0 : i32, i32, i32, i32
  }
  func.func @transform_1(%arg0: i32, %arg1: i32) -> (i32, i32, i32, i32) {
    %c0_i32 = arith.constant 0 : i32
    %c0_i32_0 = arith.constant 0 : i32
    %c0_i32_1 = arith.constant 0 : i32
    %c0_i32_2 = arith.constant 0 : i32
    return %arg0, %c0_i32, %c0_i32_0, %c0_i32_1 : i32, i32, i32, i32
  }
  func.func @transform_2(%arg0: i32, %arg1: i32) -> (i32, i32, i32) {
    %c0_i32 = arith.constant 0 : i32
    %c0_i32_0 = arith.constant 0 : i32
    return %arg0, %arg1, %c0_i32 : i32, i32, i32
  }
}

</mosaic_0001>

<llo_original>
// kernel: tpu_custom_call.1
$region0: #{tpu_custom_call.1}
  #allocation0 [shape = 'u32[]', space=smem, size = 0x4, offset = 0x4, fixed_abs, tag = 'smem constant byte address 0x4 - core index']
  #allocation1 [shape = 'u32[144,128]{1,0:T(1,128)}', space=vmem, size = 0x12000, scoped, tag = 'internal scratch']
  %s0 = inlined_call_operand.hbm [shape: f32[2,2,256,256], index: 0, kind: input, shape index: {}]
  %s1 = inlined_call_operand.vmem [shape: f32[2,2,256,64], index: 1, kind: input, shape index: {}]
  %s2 = inlined_call_operand.hbm [shape: f32[2,256,128], index: 2, kind: output, shape index: {}]
  %s3 = sld [smem:[#allocation0]]
  $region45: #{tpu_custom_call.1} parent=0
    _
  %s5 = ssub.s32 1, %s3
  %s6 = scalar_select 0, %s5, %s3
  $region1: #{tpu_custom_call.1} parent=0
    #allocation2 [shape = 'u8[1048576]{0}', space=vmem, size = 0x100000, scoped, tag = 'input window, operand 0']
    #allocation3 [shape = 's32[2]{0}', space=sflag, size = 0x8, scoped, tag = 'scoped memory for tpu_custom_call.1']
    #allocation4 [shape = 's32[2]{0}', space=sflag, size = 0x8, scoped, tag = 'scoped memory for tpu_custom_call.1']
    #allocation5 [shape = 'u8[262144]{0}', space=vmem, size = 0x40000, scoped, tag = 'output window, operand 0']
    %7 = vsyncpa [#allocation3], 0
    %s8 = scalar_lea.sflag [#allocation3], 1
    %9 = vsyncpa %s8, 0
    %10 = vsyncpa [#allocation4], 0
    %s11 = scalar_lea.sflag [#allocation4], 1
    %12 = vsyncpa %s11, 0
    loop: start=0, step=1, limit=4
    $region2: #{tpu_custom_call.1} parent=1 // loop_pre_header
      _
    $region3: #{tpu_custom_call.1} parent=1 // loop_header
      %s14 = sphi 0, %s18
      %p15 = scmp.ge.s32.totalorder %s14, 4
      %s21 = sphi 0, %s33
      %s22 = sphi 0, %s29
      %s23 = sphi 0, %s21
      %s24 = sphi 0, %s22
      %s25 = sphi 0, %s23
      %s26 = sphi 0, %s24
      %s38 = sphi 0, %s40
      %s41 = sphi 0, %s38
      %s42 = sphi 0, %s41
      %s58 = sphi 0, %s42
      %s64 = sphi 0, %s66
      %s67 = sphi 0, %s64
      %s68 = sphi 0, %s67
      %s84 = sphi 0, %s68
      %s92 = sphi 0, %s94
      %s95 = sphi 0, %s92
      %s96 = sphi 0, %s95
      %s112 = sphi 0, %s96
    $region4: #{tpu_custom_call.1} parent=1 // loop_header_branch
      %17 = sbr.rel (%p15) target = $region8
    $region5: #{tpu_custom_call.1} parent=1 // loop_body
      %s19 = ssub.s32 %s14, 1
      %s20 = ssub.s32 %s14, 2
      %s27 = sadd.s32 1, %s22
      %p28 = scmp.ge.s32.totalorder %s27, 1
      %s29 = scalar_select %p28, 0, %s27
      %s30 = sadd.s32 1, %s21
      %s31 = scalar_select %p28, %s30, %s21
      %p32 = scmp.ge.s32.totalorder %s31, 2
      %s33 = scalar_select %p32, 0, %s31
      %s34 = ssub.s32 %s21, %s33
      %s35 = ssub.s32 %s22, %s29
      %s36 = sor.u32 %s34, %s35
      %p37 = scmp.eq.s32.totalorder %s36, 0
      %s39 = sadd.s32 %s38, 1
      %s40 = scalar_select %p37, %s38, %s39
      %p43 = pneg %p37
      %p44 = scmp.eq.s32.totalorder %s14, 1
      %p45 = por %p43, %p44
      %p46 = scmp.ne.s32.totalorder %s38, %s41
      %p47 = scmp.eq.s32.totalorder %s14, 0
      %p48 = por %p46, %p47
      %p49 = scmp.ne.s32.totalorder %s38, %s41
      %p50 = scmp.eq.s32.totalorder %s19, 1
      %p51 = por %p49, %p50
      %p52 = scmp.ne.s32.totalorder %s41, %s42
      %p53 = scmp.eq.s32.totalorder %s19, 0
      %p54 = por %p52, %p53
      %p55 = scmp.ne.s32.totalorder %s41, %s42
      %p56 = scmp.eq.s32.totalorder %s20, 1
      %p57 = por %p55, %p56
      %p59 = scmp.ne.s32.totalorder %s42, %s58
      %p60 = scmp.eq.s32.totalorder %s20, 0
      %p61 = por %p59, %p60
      %s62 = ssub.s32 %s21, %s33
      %p63 = scmp.eq.s32.totalorder %s62, 0
      %s65 = sadd.s32 %s64, 1
      %s66 = scalar_select %p63, %s64, %s65
      %p69 = pneg %p63
      %p70 = scmp.eq.s32.totalorder %s14, 1
      %p71 = por %p69, %p70
      %p72 = scmp.ne.s32.totalorder %s64, %s67
      %p73 = scmp.eq.s32.totalorder %s14, 0
      %p74 = por %p72, %p73
      %p75 = scmp.ne.s32.totalorder %s64, %s67
      %p76 = scmp.eq.s32.totalorder %s19, 1
      %p77 = por %p75, %p76
      %p78 = scmp.ne.s32.totalorder %s67, %s68
      %p79 = scmp.eq.s32.totalorder %s19, 0
      %p80 = por %p78, %p79
      %p81 = scmp.ne.s32.totalorder %s67, %s68
      %p82 = scmp.eq.s32.totalorder %s20, 1
      %p83 = por %p81, %p82
      %p85 = scmp.ne.s32.totalorder %s68, %s84
      %p86 = scmp.eq.s32.totalorder %s20, 0
      %p87 = por %p85, %p86
      %s88 = ssub.s32 %s21, %s33
      %s89 = ssub.s32 %s22, %s29
      %s90 = sor.u32 %s88, %s89
      %p91 = scmp.eq.s32.totalorder %s90, 0
      %s93 = sadd.s32 %s92, 1
      %s94 = scalar_select %p91, %s92, %s93
      %p97 = pneg %p91
      %p98 = scmp.eq.s32.totalorder %s14, 1
      %p99 = por %p97, %p98
      %p100 = scmp.ne.s32.totalorder %s92, %s95
      %p101 = scmp.eq.s32.totalorder %s14, 0
      %p102 = por %p100, %p101
      %p103 = scmp.ne.s32.totalorder %s92, %s95
      %p104 = scmp.eq.s32.totalorder %s19, 1
      %p105 = por %p103, %p104
      %p106 = scmp.ne.s32.totalorder %s95, %s96
      %p107 = scmp.eq.s32.totalorder %s19, 0
      %p108 = por %p106, %p107
      %p109 = scmp.ne.s32.totalorder %s95, %s96
      %p110 = scmp.eq.s32.totalorder %s20, 1
      %p111 = por %p109, %p110
      %p113 = scmp.ne.s32.totalorder %s96, %s112
      %p114 = scmp.eq.s32.totalorder %s20, 0
      %p115 = por %p113, %p114
      %p116 = scmp.le.s32.totalorder 1, %s14
      %p117 = scmp.lt.s32.totalorder %s14, 3
      %p118 = pnand %p116, %p117
      %p119 = pneg %p118
      // Predicated region
      $region9: #{tpu_custom_call.1} parent=5 // pred_check
        _
      $region10: #{tpu_custom_call.1} parent=5 // pred_check_branch
        %121 = sbr.rel (%p118) target = $region12
      $region11: #{tpu_custom_call.1} parent=5 // pred_region
        %s122 = ssub.s32 %s14, 1
      $region12: #{tpu_custom_call.1} parent=5 // pred_fallthru
        _
      %p123 = scmp.lt.s32.totalorder %s14, 2
      // Predicated region
      $region13: #{tpu_custom_call.1} parent=5 // pred_check
        %p124 = pneg %p123
      $region14: #{tpu_custom_call.1} parent=5 // pred_check_branch
        %126 = sbr.rel (%p124) target = $region16
      $region15: #{tpu_custom_call.1} parent=5 // pred_region
        // Predicated region
        $region17: #{tpu_custom_call.1} parent=15 // pred_check
          %p127 = pneg %p48
        $region18: #{tpu_custom_call.1} parent=15 // pred_check_branch
          %129 = sbr.rel (%p127) target = $region20
        $region19: #{tpu_custom_call.1} parent=15 // pred_region
          %s130 = sand.u32 %s38, 1
          %s131 = scalar_lea.sflag [#allocation3], %s130
          %s132 = sand.u32 %s38, 1
          %s133 = smul.addr %s132, 1024
          %s134 = scalar_lea.vmem [#allocation2], %s133
          %s135 = smul.u32 32, %s22
          %s137 = ssub.s32 16384, 16384
          %138 = vsyncadd %s131, %s137
          %s139 = smul.addr %s135, 2
          %s140 = smul.addr %s21, 128
          %s141 = sadd.s32 %s139, %s140
          %s142 = smul.addr %s141, 128
          %s143 = scalar_lea.hbm %s0, %s142
          %s144 = sshll.u32 %s134, 4
          %s145 = int_to_ptr.vmem [resolvable:$true] %s144
          %150 = dma.hbm_to_vmem [thread:$0]  %s143, 16384, %s145, %s131, 256, 256, 16
        $region20: #{tpu_custom_call.1} parent=15 // pred_fallthru
          _
        // Predicated region
        $region21: #{tpu_custom_call.1} parent=15 // pred_check
          %p151 = pneg %p74
        $region22: #{tpu_custom_call.1} parent=15 // pred_check_branch
          %153 = sbr.rel (%p151) target = $region24
        $region23: #{tpu_custom_call.1} parent=15 // pred_region
          %p154 = scmp.lt.s32.totalorder %s21, 1
          %s155 = scalar_select %p154, %s21, 1
          %s156 = smul.addr %s155, 64
          %s157 = smul.addr %s156, 8
          %s158 = scalar_lea.vmem %s1, %s157
        $region24: #{tpu_custom_call.1} parent=15 // pred_fallthru
          _
      $region16: #{tpu_custom_call.1} parent=5 // pred_fallthru
        _
      %p159 = scmp.le.s32.totalorder 1, %s14
      %p160 = scmp.lt.s32.totalorder %s14, 3
      %p161 = pnand %p159, %p160
      %p162 = pneg %p161
      // Predicated region
      $region25: #{tpu_custom_call.1} parent=5 // pred_check
        _
      $region26: #{tpu_custom_call.1} parent=5 // pred_check_branch
        %164 = sbr.rel (%p161) target = $region28
      $region27: #{tpu_custom_call.1} parent=5 // pred_region
        %s165 = ssub.s32 %s14, 1
        %s166 = sand.u32 %s41, 1
        %s167 = scalar_lea.sflag [#allocation3], %s166
        %s168 = sand.u32 %s41, 1
        %s169 = smul.addr %s168, 1024
        %s170 = scalar_lea.vmem [#allocation2], %s169
        // Predicated region
        $region29: #{tpu_custom_call.1} parent=27 // pred_check
          %p171 = pneg %p54
        $region30: #{tpu_custom_call.1} parent=27 // pred_check_branch
          %173 = sbr.rel (%p171) target = $region32
        $region31: #{tpu_custom_call.1} parent=27 // pred_region
          %174 = dma.done %s167, 16384
        $region32: #{tpu_custom_call.1} parent=27 // pred_fallthru
          _
        %s175 = sand.u32 %s41, 1
        %s176 = scalar_lea.sflag [#allocation3], %s175
        %s177 = sand.u32 %s41, 1
        %s178 = smul.addr %s177, 1024
        %s179 = scalar_lea.vmem [#allocation2], %s178
        %p180 = pneg %p54
        %p181 = pneg %p51
        %p182 = scmp.lt.s32.totalorder %s23, 1
        %s183 = scalar_select %p182, %s23, 1
        %s184 = smul.addr %s183, 64
        %s185 = smul.addr %s184, 8
        %s186 = scalar_lea.vmem %s1, %s185
        %p187 = pneg %p80
        %p188 = pneg %p77
        %p189 = pneg %p108
        %p190 = pneg %p105
        %s191 = sand.u32 %s95, 1
        %s192 = scalar_lea.sflag [#allocation4], %s191
        %s193 = sand.u32 %s95, 1
        %s194 = smul.addr %s193, 256
        %s195 = scalar_lea.vmem [#allocation5], %s194
        %s196 = smul.u32 32, %s24
        %p197 = scmp.lt.s32.totalorder %s23, 1
        %s198 = scalar_select %p197, %s23, 1
        %s199 = smul.addr %s198, 64
        %s200 = smul.addr %s199, 8
        %s201 = scalar_lea.vmem %s1, %s200
        %s202 = smul.u32 32, %s24
        %v204 = vld [vmem:[%s170] sm:$0xff]
        %v205 = vld [vmem:[%s170 + $0x8] sm:$0xff]
        %v206 = vld [vmem:[%s170 + $0x10] sm:$0xff]
        %v207 = vld [vmem:[%s170 + $0x18] sm:$0xff]
        %v208 = vld [vmem:[%s170 + $0x20] sm:$0xff]
        %v209 = vld [vmem:[%s170 + $0x28] sm:$0xff]
        %v210 = vld [vmem:[%s170 + $0x30] sm:$0xff]
        %v211 = vld [vmem:[%s170 + $0x38] sm:$0xff]
        %v212 = vld [vmem:[%s170 + $0x40] sm:$0xff]
        %v213 = vld [vmem:[%s170 + $0x48] sm:$0xff]
        %v214 = vld [vmem:[%s170 + $0x50] sm:$0xff]
        %v215 = vld [vmem:[%s170 + $0x58] sm:$0xff]
        %v216 = vld [vmem:[%s170 + $0x60] sm:$0xff]
        %v217 = vld [vmem:[%s170 + $0x68] sm:$0xff]
        %v218 = vld [vmem:[%s170 + $0x70] sm:$0xff]
        %v219 = vld [vmem:[%s170 + $0x78] sm:$0xff]
        %v220 = vld [vmem:[%s170 + $0x80] sm:$0xff]
        %v221 = vld [vmem:[%s170 + $0x88] sm:$0xff]
        %v222 = vld [vmem:[%s170 + $0x90] sm:$0xff]
        %v223 = vld [vmem:[%s170 + $0x98] sm:$0xff]
        %v224 = vld [vmem:[%s170 + $0xa0] sm:$0xff]
        %v225 = vld [vmem:[%s170 + $0xa8] sm:$0xff]
        %v226 = vld [vmem:[%s170 + $0xb0] sm:$0xff]
        %v227 = vld [vmem:[%s170 + $0xb8] sm:$0xff]
        %v228 = vld [vmem:[%s170 + $0xc0] sm:$0xff]
        %v229 = vld [vmem:[%s170 + $0xc8] sm:$0xff]
        %v230 = vld [vmem:[%s170 + $0xd0] sm:$0xff]
        %v231 = vld [vmem:[%s170 + $0xd8] sm:$0xff]
        %v232 = vld [vmem:[%s170 + $0xe0] sm:$0xff]
        %v233 = vld [vmem:[%s170 + $0xe8] sm:$0xff]
        %v234 = vld [vmem:[%s170 + $0xf0] sm:$0xff]
        %v235 = vld [vmem:[%s170 + $0xf8] sm:$0xff]
        %v236 = vld [vmem:[%s170 + $0x100] sm:$0xff]
        %v237 = vld [vmem:[%s170 + $0x108] sm:$0xff]
        %v238 = vld [vmem:[%s170 + $0x110] sm:$0xff]
        %v239 = vld [vmem:[%s170 + $0x118] sm:$0xff]
        %v240 = vld [vmem:[%s170 + $0x120] sm:$0xff]
        %v241 = vld [vmem:[%s170 + $0x128] sm:$0xff]
        %v242 = vld [vmem:[%s170 + $0x130] sm:$0xff]
        %v243 = vld [vmem:[%s170 + $0x138] sm:$0xff]
        %v244 = vld [vmem:[%s170 + $0x140] sm:$0xff]
        %v245 = vld [vmem:[%s170 + $0x148] sm:$0xff]
        %v246 = vld [vmem:[%s170 + $0x150] sm:$0xff]
        %v247 = vld [vmem:[%s170 + $0x158] sm:$0xff]
        %v248 = vld [vmem:[%s170 + $0x160] sm:$0xff]
        %v249 = vld [vmem:[%s170 + $0x168] sm:$0xff]
        %v250 = vld [vmem:[%s170 + $0x170] sm:$0xff]
        %v251 = vld [vmem:[%s170 + $0x178] sm:$0xff]
        %v252 = vld [vmem:[%s170 + $0x180] sm:$0xff]
        %v253 = vld [vmem:[%s170 + $0x188] sm:$0xff]
        %v254 = vld [vmem:[%s170 + $0x190] sm:$0xff]
        %v255 = vld [vmem:[%s170 + $0x198] sm:$0xff]
        %v256 = vld [vmem:[%s170 + $0x1a0] sm:$0xff]
        %v257 = vld [vmem:[%s170 + $0x1a8] sm:$0xff]
        %v258 = vld [vmem:[%s170 + $0x1b0] sm:$0xff]
        %v259 = vld [vmem:[%s170 + $0x1b8] sm:$0xff]
        %v260 = vld [vmem:[%s170 + $0x1c0] sm:$0xff]
        %v261 = vld [vmem:[%s170 + $0x1c8] sm:$0xff]
        %v262 = vld [vmem:[%s170 + $0x1d0] sm:$0xff]
        %v263 = vld [vmem:[%s170 + $0x1d8] sm:$0xff]
        %v264 = vld [vmem:[%s170 + $0x1e0] sm:$0xff]
        %v265 = vld [vmem:[%s170 + $0x1e8] sm:$0xff]
        %v266 = vld [vmem:[%s170 + $0x1f0] sm:$0xff]
        %v267 = vld [vmem:[%s170 + $0x1f8] sm:$0xff]
        %v268 = vmax.f32 %v204, %v205
        %269 = vmax.xlane.f32.xlu0 %v268
        %v270 = vpop.xlane.xlu0 %269
        %v271 = vmax.f32 %v206, %v207
        %272 = vmax.xlane.f32.xlu0 %v271
        %v273 = vpop.xlane.xlu0 %272
        %v274 = vmax.f32 %v208, %v209
        %275 = vmax.xlane.f32.xlu0 %v274
        %v276 = vpop.xlane.xlu0 %275
        %v277 = vmax.f32 %v210, %v211
        %278 = vmax.xlane.f32.xlu0 %v277
        %v279 = vpop.xlane.xlu0 %278
        %v280 = vmax.f32 %v212, %v213
        %281 = vmax.xlane.f32.xlu0 %v280
        %v282 = vpop.xlane.xlu0 %281
        %v283 = vmax.f32 %v214, %v215
        %284 = vmax.xlane.f32.xlu0 %v283
        %v285 = vpop.xlane.xlu0 %284
        %v286 = vmax.f32 %v216, %v217
        %287 = vmax.xlane.f32.xlu0 %v286
        %v288 = vpop.xlane.xlu0 %287
        %v289 = vmax.f32 %v218, %v219
        %290 = vmax.xlane.f32.xlu0 %v289
        %v291 = vpop.xlane.xlu0 %290
        %v292 = vmax.f32 %v220, %v221
        %293 = vmax.xlane.f32.xlu0 %v292
        %v294 = vpop.xlane.xlu0 %293
        %v295 = vmax.f32 %v222, %v223
        %296 = vmax.xlane.f32.xlu0 %v295
        %v297 = vpop.xlane.xlu0 %296
        %v298 = vmax.f32 %v224, %v225
        %299 = vmax.xlane.f32.xlu0 %v298
        %v300 = vpop.xlane.xlu0 %299
        %v301 = vmax.f32 %v226, %v227
        %302 = vmax.xlane.f32.xlu0 %v301
        %v303 = vpop.xlane.xlu0 %302
        %v304 = vmax.f32 %v228, %v229
        %305 = vmax.xlane.f32.xlu0 %v304
        %v306 = vpop.xlane.xlu0 %305
        %v307 = vmax.f32 %v230, %v231
        %308 = vmax.xlane.f32.xlu0 %v307
        %v309 = vpop.xlane.xlu0 %308
        %v310 = vmax.f32 %v232, %v233
        %311 = vmax.xlane.f32.xlu0 %v310
        %v312 = vpop.xlane.xlu0 %311
        %v313 = vmax.f32 %v234, %v235
        %314 = vmax.xlane.f32.xlu0 %v313
        %v315 = vpop.xlane.xlu0 %314
        %v316 = vmax.f32 %v236, %v237
        %317 = vmax.xlane.f32.xlu0 %v316
        %v318 = vpop.xlane.xlu0 %317
        %v319 = vmax.f32 %v238, %v239
        %320 = vmax.xlane.f32.xlu0 %v319
        %v321 = vpop.xlane.xlu0 %320
        %v322 = vmax.f32 %v240, %v241
        %323 = vmax.xlane.f32.xlu0 %v322
        %v324 = vpop.xlane.xlu0 %323
        %v325 = vmax.f32 %v242, %v243
        %326 = vmax.xlane.f32.xlu0 %v325
        %v327 = vpop.xlane.xlu0 %326
        %v328 = vmax.f32 %v244, %v245
        %329 = vmax.xlane.f32.xlu0 %v328
        %v330 = vpop.xlane.xlu0 %329
        %v331 = vmax.f32 %v246, %v247
        %332 = vmax.xlane.f32.xlu0 %v331
        %v333 = vpop.xlane.xlu0 %332
        %v334 = vmax.f32 %v248, %v249
        %335 = vmax.xlane.f32.xlu0 %v334
        %v336 = vpop.xlane.xlu0 %335
        %v337 = vmax.f32 %v250, %v251
        %338 = vmax.xlane.f32.xlu0 %v337
        %v339 = vpop.xlane.xlu0 %338
        %v340 = vmax.f32 %v252, %v253
        %341 = vmax.xlane.f32.xlu0 %v340
        %v342 = vpop.xlane.xlu0 %341
        %v343 = vmax.f32 %v254, %v255
        %344 = vmax.xlane.f32.xlu0 %v343
        %v345 = vpop.xlane.xlu0 %344
        %v346 = vmax.f32 %v256, %v257
        %347 = vmax.xlane.f32.xlu0 %v346
        %v348 = vpop.xlane.xlu0 %347
        %v349 = vmax.f32 %v258, %v259
        %350 = vmax.xlane.f32.xlu0 %v349
        %v351 = vpop.xlane.xlu0 %350
        %v352 = vmax.f32 %v260, %v261
        %353 = vmax.xlane.f32.xlu0 %v352
        %v354 = vpop.xlane.xlu0 %353
        %v355 = vmax.f32 %v262, %v263
        %356 = vmax.xlane.f32.xlu0 %v355
        %v357 = vpop.xlane.xlu0 %356
        %v358 = vmax.f32 %v264, %v265
        %359 = vmax.xlane.f32.xlu0 %v358
        %v360 = vpop.xlane.xlu0 %359
        %v361 = vmax.f32 %v266, %v267
        %362 = vmax.xlane.f32.xlu0 %v361
        %v363 = vpop.xlane.xlu0 %362
        %v364 = vsub.f32 %v204, %v270
        %v365 = vsub.f32 %v205, %v270
        %v366 = vsub.f32 %v206, %v273
        %v367 = vsub.f32 %v207, %v273
        %v368 = vsub.f32 %v208, %v276
        %v369 = vsub.f32 %v209, %v276
        %v370 = vsub.f32 %v210, %v279
        %v371 = vsub.f32 %v211, %v279
        %v372 = vsub.f32 %v212, %v282
        %v373 = vsub.f32 %v213, %v282
        %v374 = vsub.f32 %v214, %v285
        %v375 = vsub.f32 %v215, %v285
        %v376 = vsub.f32 %v216, %v288
        %v377 = vsub.f32 %v217, %v288
        %v378 = vsub.f32 %v218, %v291
        %v379 = vsub.f32 %v219, %v291
        %v380 = vsub.f32 %v220, %v294
        %v381 = vsub.f32 %v221, %v294
        %v382 = vsub.f32 %v222, %v297
        %v383 = vsub.f32 %v223, %v297
        %v384 = vsub.f32 %v224, %v300
        %v385 = vsub.f32 %v225, %v300
        %v386 = vsub.f32 %v226, %v303
        %v387 = vsub.f32 %v227, %v303
        %v388 = vsub.f32 %v228, %v306
        %v389 = vsub.f32 %v229, %v306
        %v390 = vsub.f32 %v230, %v309
        %v391 = vsub.f32 %v231, %v309
        %v392 = vsub.f32 %v232, %v312
        %v393 = vsub.f32 %v233, %v312
        %v394 = vsub.f32 %v234, %v315
        %v395 = vsub.f32 %v235, %v315
        %v396 = vsub.f32 %v236, %v318
        %v397 = vsub.f32 %v237, %v318
        %v398 = vsub.f32 %v238, %v321
        %v399 = vsub.f32 %v239, %v321
        %v400 = vsub.f32 %v240, %v324
        %v401 = vsub.f32 %v241, %v324
        %v402 = vsub.f32 %v242, %v327
        %v403 = vsub.f32 %v243, %v327
        %v404 = vsub.f32 %v244, %v330
        %v405 = vsub.f32 %v245, %v330
        %v406 = vsub.f32 %v246, %v333
        %v407 = vsub.f32 %v247, %v333
        %v408 = vsub.f32 %v248, %v336
        %v409 = vsub.f32 %v249, %v336
        %v410 = vsub.f32 %v250, %v339
        %v411 = vsub.f32 %v251, %v339
        %v412 = vsub.f32 %v252, %v342
        %v413 = vsub.f32 %v253, %v342
        %v414 = vsub.f32 %v254, %v345
        %v415 = vsub.f32 %v255, %v345
        %v416 = vsub.f32 %v256, %v348
        %v417 = vsub.f32 %v257, %v348
        %v418 = vsub.f32 %v258, %v351
        %v419 = vsub.f32 %v259, %v351
        %v420 = vsub.f32 %v260, %v354
        %v421 = vsub.f32 %v261, %v354
        %v422 = vsub.f32 %v262, %v357
        %v423 = vsub.f32 %v263, %v357
        %v424 = vsub.f32 %v264, %v360
        %v425 = vsub.f32 %v265, %v360
        %v426 = vsub.f32 %v266, %v363
        %v427 = vsub.f32 %v267, %v363
        %v428 = vmul.f32 %v364, 1.442695
        %v429 = vpow.pop %v428
        %v430 = vmul.f32 %v365, 1.442695
        %v431 = vpow.pop %v430
        %v432 = vmul.f32 %v366, 1.442695
        %v433 = vpow.pop %v432
        %v434 = vmul.f32 %v367, 1.442695
        %v435 = vpow.pop %v434
        %v436 = vmul.f32 %v368, 1.442695
        %v437 = vpow.pop %v436
        %v438 = vmul.f32 %v369, 1.442695
        %v439 = vpow.pop %v438
        %v440 = vmul.f32 %v370, 1.442695
        %v441 = vpow.pop %v440
        %v442 = vmul.f32 %v371, 1.442695
        %v443 = vpow.pop %v442
        %v444 = vmul.f32 %v372, 1.442695
        %v445 = vpow.pop %v444
        %v446 = vmul.f32 %v373, 1.442695
        %v447 = vpow.pop %v446
        %v448 = vmul.f32 %v374, 1.442695
        %v449 = vpow.pop %v448
        %v450 = vmul.f32 %v375, 1.442695
        %v451 = vpow.pop %v450
        %v452 = vmul.f32 %v376, 1.442695
        %v453 = vpow.pop %v452
        %v454 = vmul.f32 %v377, 1.442695
        %v455 = vpow.pop %v454
        %v456 = vmul.f32 %v378, 1.442695
        %v457 = vpow.pop %v456
        %v458 = vmul.f32 %v379, 1.442695
        %v459 = vpow.pop %v458
        %v460 = vmul.f32 %v380, 1.442695
        %v461 = vpow.pop %v460
        %v462 = vmul.f32 %v381, 1.442695
        %v463 = vpow.pop %v462
        %v464 = vmul.f32 %v382, 1.442695
        %v465 = vpow.pop %v464
        %v466 = vmul.f32 %v383, 1.442695
        %v467 = vpow.pop %v466
        %v468 = vmul.f32 %v384, 1.442695
        %v469 = vpow.pop %v468
        %v470 = vmul.f32 %v385, 1.442695
        %v471 = vpow.pop %v470
        %v472 = vmul.f32 %v386, 1.442695
        %v473 = vpow.pop %v472
        %v474 = vmul.f32 %v387, 1.442695
        %v475 = vpow.pop %v474
        %v476 = vmul.f32 %v388, 1.442695
        %v477 = vpow.pop %v476
        %v478 = vmul.f32 %v389, 1.442695
        %v479 = vpow.pop %v478
        %v480 = vmul.f32 %v390, 1.442695
        %v481 = vpow.pop %v480
        %v482 = vmul.f32 %v391, 1.442695
        %v483 = vpow.pop %v482
        %v484 = vmul.f32 %v392, 1.442695
        %v485 = vpow.pop %v484
        %v486 = vmul.f32 %v393, 1.442695
        %v487 = vpow.pop %v486
        %v488 = vmul.f32 %v394, 1.442695
        %v489 = vpow.pop %v488
        %v490 = vmul.f32 %v395, 1.442695
        %v491 = vpow.pop %v490
        %v492 = vmul.f32 %v396, 1.442695
        %v493 = vpow.pop %v492
        %v494 = vmul.f32 %v397, 1.442695
        %v495 = vpow.pop %v494
        %v496 = vmul.f32 %v398, 1.442695
        %v497 = vpow.pop %v496
        %v498 = vmul.f32 %v399, 1.442695
        %v499 = vpow.pop %v498
        %v500 = vmul.f32 %v400, 1.442695
        %v501 = vpow.pop %v500
        %v502 = vmul.f32 %v401, 1.442695
        %v503 = vpow.pop %v502
        %v504 = vmul.f32 %v402, 1.442695
        %v505 = vpow.pop %v504
        %v506 = vmul.f32 %v403, 1.442695
        %v507 = vpow.pop %v506
        %v508 = vmul.f32 %v404, 1.442695
        %v509 = vpow.pop %v508
        %v510 = vmul.f32 %v405, 1.442695
        %v511 = vpow.pop %v510
        %v512 = vmul.f32 %v406, 1.442695
        %v513 = vpow.pop %v512
        %v514 = vmul.f32 %v407, 1.442695
        %v515 = vpow.pop %v514
        %v516 = vmul.f32 %v408, 1.442695
        %v517 = vpow.pop %v516
        %v518 = vmul.f32 %v409, 1.442695
        %v519 = vpow.pop %v518
        %v520 = vmul.f32 %v410, 1.442695
        %v521 = vpow.pop %v520
        %v522 = vmul.f32 %v411, 1.442695
        %v523 = vpow.pop %v522
        %v524 = vmul.f32 %v412, 1.442695
        %v525 = vpow.pop %v524
        %v526 = vmul.f32 %v413, 1.442695
        %v527 = vpow.pop %v526
        %v528 = vmul.f32 %v414, 1.442695
        %v529 = vpow.pop %v528
        %v530 = vmul.f32 %v415, 1.442695
        %v531 = vpow.pop %v530
        %v532 = vmul.f32 %v416, 1.442695
        %v533 = vpow.pop %v532
        %v534 = vmul.f32 %v417, 1.442695
        %v535 = vpow.pop %v534
        %v536 = vmul.f32 %v418, 1.442695
        %v537 = vpow.pop %v536
        %v538 = vmul.f32 %v419, 1.442695
        %v539 = vpow.pop %v538
        %v540 = vmul.f32 %v420, 1.442695
        %v541 = vpow.pop %v540
        %v542 = vmul.f32 %v421, 1.442695
        %v543 = vpow.pop %v542
        %v544 = vmul.f32 %v422, 1.442695
        %v545 = vpow.pop %v544
        %v546 = vmul.f32 %v423, 1.442695
        %v547 = vpow.pop %v546
        %v548 = vmul.f32 %v424, 1.442695
        %v549 = vpow.pop %v548
        %v550 = vmul.f32 %v425, 1.442695
        %v551 = vpow.pop %v550
        %v552 = vmul.f32 %v426, 1.442695
        %v553 = vpow.pop %v552
        %v554 = vmul.f32 %v427, 1.442695
        %v555 = vpow.pop %v554
        %v556 = vpack.c.bf16 %v433, %v429
        %v557 = vpack.c.bf16 %v435, %v431
        %v558 = vpack.c.bf16 %v441, %v437
        %v559 = vpack.c.bf16 %v443, %v439
        %v560 = vpack.c.bf16 %v449, %v445
        %v561 = vpack.c.bf16 %v451, %v447
        %v562 = vpack.c.bf16 %v457, %v453
        %v563 = vpack.c.bf16 %v459, %v455
        %v564 = vpack.c.bf16 %v465, %v461
        %v565 = vpack.c.bf16 %v467, %v463
        %v566 = vpack.c.bf16 %v473, %v469
        %v567 = vpack.c.bf16 %v475, %v471
        %v568 = vpack.c.bf16 %v481, %v477
        %v569 = vpack.c.bf16 %v483, %v479
        %v570 = vpack.c.bf16 %v489, %v485
        %v571 = vpack.c.bf16 %v491, %v487
        %v572 = vpack.c.bf16 %v497, %v493
        %v573 = vpack.c.bf16 %v499, %v495
        %v574 = vpack.c.bf16 %v505, %v501
        %v575 = vpack.c.bf16 %v507, %v503
        %v576 = vpack.c.bf16 %v513, %v509
        %v577 = vpack.c.bf16 %v515, %v511
        %v578 = vpack.c.bf16 %v521, %v517
        %v579 = vpack.c.bf16 %v523, %v519
        %v580 = vpack.c.bf16 %v529, %v525
        %v581 = vpack.c.bf16 %v531, %v527
        %v582 = vpack.c.bf16 %v537, %v533
        %v583 = vpack.c.bf16 %v539, %v535
        %v584 = vpack.c.bf16 %v545, %v541
        %v585 = vpack.c.bf16 %v547, %v543
        %v586 = vpack.c.bf16 %v553, %v549
        %v587 = vpack.c.bf16 %v555, %v551
        %v588 = vunpack.c.l.bf16 %v556
        %v589 = vunpack.c.l.bf16 %v557
        %v590 = vunpack.c.h.bf16 %v556
        %v591 = vunpack.c.h.bf16 %v557
        %v592 = vunpack.c.l.bf16 %v558
        %v593 = vunpack.c.l.bf16 %v559
        %v594 = vunpack.c.h.bf16 %v558
        %v595 = vunpack.c.h.bf16 %v559
        %v596 = vunpack.c.l.bf16 %v560
        %v597 = vunpack.c.l.bf16 %v561
        %v598 = vunpack.c.h.bf16 %v560
        %v599 = vunpack.c.h.bf16 %v561
        %v600 = vunpack.c.l.bf16 %v562
        %v601 = vunpack.c.l.bf16 %v563
        %v602 = vunpack.c.h.bf16 %v562
        %v603 = vunpack.c.h.bf16 %v563
        %v604 = vunpack.c.l.bf16 %v564
        %v605 = vunpack.c.l.bf16 %v565
        %v606 = vunpack.c.h.bf16 %v564
        %v607 = vunpack.c.h.bf16 %v565
        %v608 = vunpack.c.l.bf16 %v566
        %v609 = vunpack.c.l.bf16 %v567
        %v610 = vunpack.c.h.bf16 %v566
        %v611 = vunpack.c.h.bf16 %v567
        %v612 = vunpack.c.l.bf16 %v568
        %v613 = vunpack.c.l.bf16 %v569
        %v614 = vunpack.c.h.bf16 %v568
        %v615 = vunpack.c.h.bf16 %v569
        %v616 = vunpack.c.l.bf16 %v570
        %v617 = vunpack.c.l.bf16 %v571
        %v618 = vunpack.c.h.bf16 %v570
        %v619 = vunpack.c.h.bf16 %v571
        %v620 = vunpack.c.l.bf16 %v572
        %v621 = vunpack.c.l.bf16 %v573
        %v622 = vunpack.c.h.bf16 %v572
        %v623 = vunpack.c.h.bf16 %v573
        %v624 = vunpack.c.l.bf16 %v574
        %v625 = vunpack.c.l.bf16 %v575
        %v626 = vunpack.c.h.bf16 %v574
        %v627 = vunpack.c.h.bf16 %v575
        %v628 = vunpack.c.l.bf16 %v576
        %v629 = vunpack.c.l.bf16 %v577
        %v630 = vunpack.c.h.bf16 %v576
        %v631 = vunpack.c.h.bf16 %v577
        %v632 = vunpack.c.l.bf16 %v578
        %v633 = vunpack.c.l.bf16 %v579
        %v634 = vunpack.c.h.bf16 %v578
        %v635 = vunpack.c.h.bf16 %v579
        %v636 = vunpack.c.l.bf16 %v580
        %v637 = vunpack.c.l.bf16 %v581
        %v638 = vunpack.c.h.bf16 %v580
        %v639 = vunpack.c.h.bf16 %v581
        %v640 = vunpack.c.l.bf16 %v582
        %v641 = vunpack.c.l.bf16 %v583
        %v642 = vunpack.c.h.bf16 %v582
        %v643 = vunpack.c.h.bf16 %v583
        %v644 = vunpack.c.l.bf16 %v584
        %v645 = vunpack.c.l.bf16 %v585
        %v646 = vunpack.c.h.bf16 %v584
        %v647 = vunpack.c.h.bf16 %v585
        %v648 = vunpack.c.l.bf16 %v586
        %v649 = vunpack.c.l.bf16 %v587
        %v650 = vunpack.c.h.bf16 %v586
        %v651 = vunpack.c.h.bf16 %v587
        %v652 = vadd.f32 %v588, %v589
        %653 = vadd.xlane.f32.xlu0 %v652
        %v654 = vpop.xlane.xlu0 %653
        %v655 = vadd.f32 %v590, %v591
        %656 = vadd.xlane.f32.xlu0 %v655
        %v657 = vpop.xlane.xlu0 %656
        %v658 = vadd.f32 %v592, %v593
        %659 = vadd.xlane.f32.xlu0 %v658
        %v660 = vpop.xlane.xlu0 %659
        %v661 = vadd.f32 %v594, %v595
        %662 = vadd.xlane.f32.xlu0 %v661
        %v663 = vpop.xlane.xlu0 %662
        %v664 = vadd.f32 %v596, %v597
        %665 = vadd.xlane.f32.xlu0 %v664
        %v666 = vpop.xlane.xlu0 %665
        %v667 = vadd.f32 %v598, %v599
        %668 = vadd.xlane.f32.xlu0 %v667
        %v669 = vpop.xlane.xlu0 %668
        %v670 = vadd.f32 %v600, %v601
        %671 = vadd.xlane.f32.xlu0 %v670
        %v672 = vpop.xlane.xlu0 %671
        %v673 = vadd.f32 %v602, %v603
        %674 = vadd.xlane.f32.xlu0 %v673
        %v675 = vpop.xlane.xlu0 %674
        %v676 = vadd.f32 %v604, %v605
        %677 = vadd.xlane.f32.xlu0 %v676
        %v678 = vpop.xlane.xlu0 %677
        %v679 = vadd.f32 %v606, %v607
        %680 = vadd.xlane.f32.xlu0 %v679
        %v681 = vpop.xlane.xlu0 %680
        %v682 = vadd.f32 %v608, %v609
        %683 = vadd.xlane.f32.xlu0 %v682
        %v684 = vpop.xlane.xlu0 %683
        %v685 = vadd.f32 %v610, %v611
        %686 = vadd.xlane.f32.xlu0 %v685
        %v687 = vpop.xlane.xlu0 %686
        %v688 = vadd.f32 %v612, %v613
        %689 = vadd.xlane.f32.xlu0 %v688
        %v690 = vpop.xlane.xlu0 %689
        %v691 = vadd.f32 %v614, %v615
        %692 = vadd.xlane.f32.xlu0 %v691
        %v693 = vpop.xlane.xlu0 %692
        %v694 = vadd.f32 %v616, %v617
        %695 = vadd.xlane.f32.xlu0 %v694
        %v696 = vpop.xlane.xlu0 %695
        %v697 = vadd.f32 %v618, %v619
        %698 = vadd.xlane.f32.xlu0 %v697
        %v699 = vpop.xlane.xlu0 %698
        %v700 = vadd.f32 %v620, %v621
        %701 = vadd.xlane.f32.xlu0 %v700
        %v702 = vpop.xlane.xlu0 %701
        %v703 = vadd.f32 %v622, %v623
        %704 = vadd.xlane.f32.xlu0 %v703
        %v705 = vpop.xlane.xlu0 %704
        %v706 = vadd.f32 %v624, %v625
        %707 = vadd.xlane.f32.xlu0 %v706
        %v708 = vpop.xlane.xlu0 %707
        %v709 = vadd.f32 %v626, %v627
        %710 = vadd.xlane.f32.xlu0 %v709
        %v711 = vpop.xlane.xlu0 %710
        %v712 = vadd.f32 %v628, %v629
        %713 = vadd.xlane.f32.xlu0 %v712
        %v714 = vpop.xlane.xlu0 %713
        %v715 = vadd.f32 %v630, %v631
        %716 = vadd.xlane.f32.xlu0 %v715
        %v717 = vpop.xlane.xlu0 %716
        %v718 = vadd.f32 %v632, %v633
        %719 = vadd.xlane.f32.xlu0 %v718
        %v720 = vpop.xlane.xlu0 %719
        %v721 = vadd.f32 %v634, %v635
        %722 = vadd.xlane.f32.xlu0 %v721
        %v723 = vpop.xlane.xlu0 %722
        %v724 = vadd.f32 %v636, %v637
        %725 = vadd.xlane.f32.xlu0 %v724
        %v726 = vpop.xlane.xlu0 %725
        %v727 = vadd.f32 %v638, %v639
        %728 = vadd.xlane.f32.xlu0 %v727
        %v729 = vpop.xlane.xlu0 %728
        %v730 = vadd.f32 %v640, %v641
        %731 = vadd.xlane.f32.xlu0 %v730
        %v732 = vpop.xlane.xlu0 %731
        %v733 = vadd.f32 %v642, %v643
        %734 = vadd.xlane.f32.xlu0 %v733
        %v735 = vpop.xlane.xlu0 %734
        %v736 = vadd.f32 %v644, %v645
        %737 = vadd.xlane.f32.xlu0 %v736
        %v738 = vpop.xlane.xlu0 %737
        %v739 = vadd.f32 %v646, %v647
        %740 = vadd.xlane.f32.xlu0 %v739
        %v741 = vpop.xlane.xlu0 %740
        %v742 = vadd.f32 %v648, %v649
        %743 = vadd.xlane.f32.xlu0 %v742
        %v744 = vpop.xlane.xlu0 %743
        %v745 = vadd.f32 %v650, %v651
        %746 = vadd.xlane.f32.xlu0 %v745
        %v747 = vpop.xlane.xlu0 %746
        %v748 = vld [vmem:[%s201] sm:$0xff]
        %v749 = vld [vmem:[%s201 + $0x8] sm:$0xff]
        %v750 = vld [vmem:[%s201 + $0x10] sm:$0xff]
        %v751 = vld [vmem:[%s201 + $0x18] sm:$0xff]
        %v752 = vld [vmem:[%s201 + $0x20] sm:$0xff]
        %v753 = vld [vmem:[%s201 + $0x28] sm:$0xff]
        %v754 = vld [vmem:[%s201 + $0x30] sm:$0xff]
        %v755 = vld [vmem:[%s201 + $0x38] sm:$0xff]
        %v756 = vld [vmem:[%s201 + $0x40] sm:$0xff]
        %v757 = vld [vmem:[%s201 + $0x48] sm:$0xff]
        %v758 = vld [vmem:[%s201 + $0x50] sm:$0xff]
        %v759 = vld [vmem:[%s201 + $0x58] sm:$0xff]
        %v760 = vld [vmem:[%s201 + $0x60] sm:$0xff]
        %v761 = vld [vmem:[%s201 + $0x68] sm:$0xff]
        %v762 = vld [vmem:[%s201 + $0x70] sm:$0xff]
        %v763 = vld [vmem:[%s201 + $0x78] sm:$0xff]
        %v764 = vld [vmem:[%s201 + $0x80] sm:$0xff]
        %v765 = vld [vmem:[%s201 + $0x88] sm:$0xff]
        %v766 = vld [vmem:[%s201 + $0x90] sm:$0xff]
        %v767 = vld [vmem:[%s201 + $0x98] sm:$0xff]
        %v768 = vld [vmem:[%s201 + $0xa0] sm:$0xff]
        %v769 = vld [vmem:[%s201 + $0xa8] sm:$0xff]
        %v770 = vld [vmem:[%s201 + $0xb0] sm:$0xff]
        %v771 = vld [vmem:[%s201 + $0xb8] sm:$0xff]
        %v772 = vld [vmem:[%s201 + $0xc0] sm:$0xff]
        %v773 = vld [vmem:[%s201 + $0xc8] sm:$0xff]
        %v774 = vld [vmem:[%s201 + $0xd0] sm:$0xff]
        %v775 = vld [vmem:[%s201 + $0xd8] sm:$0xff]
        %v776 = vld [vmem:[%s201 + $0xe0] sm:$0xff]
        %v777 = vld [vmem:[%s201 + $0xe8] sm:$0xff]
        %v778 = vld [vmem:[%s201 + $0xf0] sm:$0xff]
        %v779 = vld [vmem:[%s201 + $0xf8] sm:$0xff]
        %v780 = vpack.c.bf16 %v749, %v748
        %v781 = vpack.c.bf16 %v751, %v750
        %v782 = vpack.c.bf16 %v753, %v752
        %v783 = vpack.c.bf16 %v755, %v754
        %v784 = vpack.c.bf16 %v757, %v756
        %v785 = vpack.c.bf16 %v759, %v758
        %v786 = vpack.c.bf16 %v761, %v760
        %v787 = vpack.c.bf16 %v763, %v762
        %v788 = vpack.c.bf16 %v765, %v764
        %v789 = vpack.c.bf16 %v767, %v766
        %v790 = vpack.c.bf16 %v769, %v768
        %v791 = vpack.c.bf16 %v771, %v770
        %v792 = vpack.c.bf16 %v773, %v772
        %v793 = vpack.c.bf16 %v775, %v774
        %v794 = vpack.c.bf16 %v777, %v776
        %v795 = vpack.c.bf16 %v779, %v778
        %796 = vmatprep.subr.bf16.mxu0 0
        %797 = vmatpush1.bf16.msra.mxu0 %v780
        %798 = vmatprep.subr.bf16.mxu0 0
        %799 = vmatpush1.bf16.msra.mxu0 %v781
        %800 = vmatprep.subr.bf16.mxu0 0
        %801 = vmatpush1.bf16.msra.mxu0 %v782
        %802 = vmatprep.subr.bf16.mxu0 0
        %803 = vmatpush1.bf16.msra.mxu0 %v783
        %804 = vmatprep.subr.bf16.mxu0 0
        %805 = vmatpush1.bf16.msra.mxu0 %v784
        %806 = vmatprep.subr.bf16.mxu0 0
        %807 = vmatpush1.bf16.msra.mxu0 %v785
        %808 = vmatprep.subr.bf16.mxu0 0
        %809 = vmatpush1.bf16.msra.mxu0 %v786
        %810 = vmatprep.subr.bf16.mxu0 0
        %811 = vmatpush1.bf16.msra.mxu0 %v787
        %812 = vmatprep.subr.bf16.mxu0 0
        %813 = vmatpush1.bf16.msra.mxu0 %v788
        %814 = vmatprep.subr.bf16.mxu0 0
        %815 = vmatpush1.bf16.msra.mxu0 %v789
        %816 = vmatprep.subr.bf16.mxu0 0
        %817 = vmatpush1.bf16.msra.mxu0 %v790
        %818 = vmatprep.subr.bf16.mxu0 0
        %819 = vmatpush1.bf16.msra.mxu0 %v791
        %820 = vmatprep.subr.bf16.mxu0 0
        %821 = vmatpush1.bf16.msra.mxu0 %v792
        %822 = vmatprep.subr.bf16.mxu0 0
        %823 = vmatpush1.bf16.msra.mxu0 %v793
        %824 = vmatprep.subr.bf16.mxu0 0
        %825 = vmatpush1.bf16.msra.mxu0 %v794
        %826 = vmatprep.subr.bf16.mxu0 0
        %827 = vmatpush1.bf16.msra.mxu0 %v795
        %828 = vmatprep.mubr.bf16.mxu0 %v557
        %829 = vmatmul.mubr.bf16.gmra.mrb[0].mxu0 %v556
        %v830 = vpop.f32.mrb[0].mxu0
        %v831 = vadd.f32 0.0, %v830
        %v832 = vpop.f32.mrb[0].mxu0
        %v833 = vpop.f32.mrb[0].mxu0
        %v834 = vadd.f32 0.0, %v833
        %v835 = vpop.f32.mrb[0].mxu0
        %836 = vmatprep.mubr.bf16.mxu0 %v559
        %837 = vmatmul.mubr.bf16.gmra.mrb[0].mxu0 %v558
        %v838 = vpop.f32.mrb[0].mxu0
        %v839 = vadd.f32 0.0, %v838
        %v840 = vpop.f32.mrb[0].mxu0
        %v841 = vpop.f32.mrb[0].mxu0
        %v842 = vadd.f32 0.0, %v841
        %v843 = vpop.f32.mrb[0].mxu0
        %844 = vmatprep.mubr.bf16.mxu0 %v561
        %845 = vmatmul.mubr.bf16.gmra.mrb[0].mxu0 %v560
        %v846 = vpop.f32.mrb[0].mxu0
        %v847 = vadd.f32 0.0, %v846
        %v848 = vpop.f32.mrb[0].mxu0
        %v849 = vpop.f32.mrb[0].mxu0
        %v850 = vadd.f32 0.0, %v849
        %v851 = vpop.f32.mrb[0].mxu0
        %852 = vmatprep.mubr.bf16.mxu0 %v563
        %853 = vmatmul.mubr.bf16.gmra.mrb[0].mxu0 %v562
        %v854 = vpop.f32.mrb[0].mxu0
        %v855 = vadd.f32 0.0, %v854
        %v856 = vpop.f32.mrb[0].mxu0
        %v857 = vpop.f32.mrb[0].mxu0
        %v858 = vadd.f32 0.0, %v857
        %v859 = vpop.f32.mrb[0].mxu0
        %860 = vmatprep.mubr.bf16.mxu0 %v565
        %861 = vmatmul.mubr.bf16.gmra.mrb[0].mxu0 %v564
        %v862 = vpop.f32.mrb[0].mxu0
        %v863 = vadd.f32 0.0, %v862
        %v864 = vpop.f32.mrb[0].mxu0
        %v865 = vpop.f32.mrb[0].mxu0
        %v866 = vadd.f32 0.0, %v865
        %v867 = vpop.f32.mrb[0].mxu0
        %868 = vmatprep.mubr.bf16.mxu0 %v567
        %869 = vmatmul.mubr.bf16.gmra.mrb[0].mxu0 %v566
        %v870 = vpop.f32.mrb[0].mxu0
        %v871 = vadd.f32 0.0, %v870
        %v872 = vpop.f32.mrb[0].mxu0
        %v873 = vpop.f32.mrb[0].mxu0
        %v874 = vadd.f32 0.0, %v873
        %v875 = vpop.f32.mrb[0].mxu0
        %876 = vmatprep.mubr.bf16.mxu0 %v569
        %877 = vmatmul.mubr.bf16.gmra.mrb[0].mxu0 %v568
        %v878 = vpop.f32.mrb[0].mxu0
        %v879 = vadd.f32 0.0, %v878
        %v880 = vpop.f32.mrb[0].mxu0
        %v881 = vpop.f32.mrb[0].mxu0
        %v882 = vadd.f32 0.0, %v881
        %v883 = vpop.f32.mrb[0].mxu0
        %884 = vmatprep.mubr.bf16.mxu0 %v571
        %885 = vmatmul.mubr.bf16.gmra.mrb[0].mxu0 %v570
        %v886 = vpop.f32.mrb[0].mxu0
        %v887 = vadd.f32 0.0, %v886
        %v888 = vpop.f32.mrb[0].mxu0
        %v889 = vpop.f32.mrb[0].mxu0
        %v890 = vadd.f32 0.0, %v889
        %v891 = vpop.f32.mrb[0].mxu0
        %892 = vmatprep.mubr.bf16.mxu0 %v573
        %893 = vmatmul.mubr.bf16.gmra.mrb[0].mxu0 %v572
        %v894 = vpop.f32.mrb[0].mxu0
        %v895 = vadd.f32 0.0, %v894
        %v896 = vpop.f32.mrb[0].mxu0
        %v897 = vpop.f32.mrb[0].mxu0
        %v898 = vadd.f32 0.0, %v897
        %v899 = vpop.f32.mrb[0].mxu0
        %900 = vmatprep.mubr.bf16.mxu0 %v575
        %901 = vmatmul.mubr.bf16.gmra.mrb[0].mxu0 %v574
        %v902 = vpop.f32.mrb[0].mxu0
        %v903 = vadd.f32 0.0, %v902
        %v904 = vpop.f32.mrb[0].mxu0
        %v905 = vpop.f32.mrb[0].mxu0
        %v906 = vadd.f32 0.0, %v905
        %v907 = vpop.f32.mrb[0].mxu0
        %908 = vmatprep.mubr.bf16.mxu0 %v577
        %909 = vmatmul.mubr.bf16.gmra.mrb[0].mxu0 %v576
        %v910 = vpop.f32.mrb[0].mxu0
        %v911 = vadd.f32 0.0, %v910
        %v912 = vpop.f32.mrb[0].mxu0
        %v913 = vpop.f32.mrb[0].mxu0
        %v914 = vadd.f32 0.0, %v913
        %v915 = vpop.f32.mrb[0].mxu0
        %916 = vmatprep.mubr.bf16.mxu0 %v579
        %917 = vmatmul.mubr.bf16.gmra.mrb[0].mxu0 %v578
        %v918 = vpop.f32.mrb[0].mxu0
        %v919 = vadd.f32 0.0, %v918
        %v920 = vpop.f32.mrb[0].mxu0
        %v921 = vpop.f32.mrb[0].mxu0
        %v922 = vadd.f32 0.0, %v921
        %v923 = vpop.f32.mrb[0].mxu0
        %924 = vmatprep.mubr.bf16.mxu0 %v581
        %925 = vmatmul.mubr.bf16.gmra.mrb[0].mxu0 %v580
        %v926 = vpop.f32.mrb[0].mxu0
        %v927 = vadd.f32 0.0, %v926
        %v928 = vpop.f32.mrb[0].mxu0
        %v929 = vpop.f32.mrb[0].mxu0
        %v930 = vadd.f32 0.0, %v929
        %v931 = vpop.f32.mrb[0].mxu0
        %932 = vmatprep.mubr.bf16.mxu0 %v583
        %933 = vmatmul.mubr.bf16.gmra.mrb[0].mxu0 %v582
        %v934 = vpop.f32.mrb[0].mxu0
        %v935 = vadd.f32 0.0, %v934
        %v936 = vpop.f32.mrb[0].mxu0
        %v937 = vpop.f32.mrb[0].mxu0
        %v938 = vadd.f32 0.0, %v937
        %v939 = vpop.f32.mrb[0].mxu0
        %940 = vmatprep.mubr.bf16.mxu0 %v585
        %941 = vmatmul.mubr.bf16.gmra.mrb[0].mxu0 %v584
        %v942 = vpop.f32.mrb[0].mxu0
        %v943 = vadd.f32 0.0, %v942
        %v944 = vpop.f32.mrb[0].mxu0
        %v945 = vpop.f32.mrb[0].mxu0
        %v946 = vadd.f32 0.0, %v945
        %v947 = vpop.f32.mrb[0].mxu0
        %948 = vmatprep.mubr.bf16.mxu0 %v587
        %949 = vmatmul.mubr.bf16.gmra.mrb[0].mxu0 %v586
        %v950 = vpop.f32.mrb[0].mxu0
        %v951 = vadd.f32 0.0, %v950
        %v952 = vpop.f32.mrb[0].mxu0
        %v953 = vpop.f32.mrb[0].mxu0
        %v954 = vadd.f32 0.0, %v953
        %v955 = vpop.f32.mrb[0].mxu0
        %956 = vdwg.mxu0
        %v957 = vrcp.pop %v654
        %v958 = vrcp.pop %v657
        %v959 = vrcp.pop %v660
        %v960 = vrcp.pop %v663
        %v961 = vrcp.pop %v666
        %v962 = vrcp.pop %v669
        %v963 = vrcp.pop %v672
        %v964 = vrcp.pop %v675
        %v965 = vrcp.pop %v678
        %v966 = vrcp.pop %v681
        %v967 = vrcp.pop %v684
        %v968 = vrcp.pop %v687
        %v969 = vrcp.pop %v690
        %v970 = vrcp.pop %v693
        %v971 = vrcp.pop %v696
        %v972 = vrcp.pop %v699
        %v973 = vrcp.pop %v702
        %v974 = vrcp.pop %v705
        %v975 = vrcp.pop %v708
        %v976 = vrcp.pop %v711
        %v977 = vrcp.pop %v714
        %v978 = vrcp.pop %v717
        %v979 = vrcp.pop %v720
        %v980 = vrcp.pop %v723
        %v981 = vrcp.pop %v726
        %v982 = vrcp.pop %v729
        %v983 = vrcp.pop %v732
        %v984 = vrcp.pop %v735
        %v985 = vrcp.pop %v738
        %v986 = vrcp.pop %v741
        %v987 = vrcp.pop %v744
        %v988 = vrcp.pop %v747
        %v989 = vmul.f32 %v831, %v957
        %v990 = vmul.f32 %v834, %v958
        %v991 = vmul.f32 %v839, %v959
        %v992 = vmul.f32 %v842, %v960
        %v993 = vmul.f32 %v847, %v961
        %v994 = vmul.f32 %v850, %v962
        %v995 = vmul.f32 %v855, %v963
        %v996 = vmul.f32 %v858, %v964
        %v997 = vmul.f32 %v863, %v965
        %v998 = vmul.f32 %v866, %v966
        %v999 = vmul.f32 %v871, %v967
        %v1000 = vmul.f32 %v874, %v968
        %v1001 = vmul.f32 %v879, %v969
        %v1002 = vmul.f32 %v882, %v970
        %v1003 = vmul.f32 %v887, %v971
        %v1004 = vmul.f32 %v890, %v972
        %v1005 = vmul.f32 %v895, %v973
        %v1006 = vmul.f32 %v898, %v974
        %v1007 = vmul.f32 %v903, %v975
        %v1008 = vmul.f32 %v906, %v976
        %v1009 = vmul.f32 %v911, %v977
        %v1010 = vmul.f32 %v914, %v978
        %v1011 = vmul.f32 %v919, %v979
        %v1012 = vmul.f32 %v922, %v980
        %v1013 = vmul.f32 %v927, %v981
        %v1014 = vmul.f32 %v930, %v982
        %v1015 = vmul.f32 %v935, %v983
        %v1016 = vmul.f32 %v938, %v984
        %v1017 = vmul.f32 %v943, %v985
        %v1018 = vmul.f32 %v946, %v986
        %v1019 = vmul.f32 %v951, %v987
        %v1020 = vmul.f32 %v954, %v988
        %s1021 = scalar_lea.vmem %s170, 512 [#allocation2]
        %v1022 = vld [vmem:[%s1021] sm:$0xff]
        %v1023 = vld [vmem:[%s1021 + $0x8] sm:$0xff]
        %v1024 = vld [vmem:[%s1021 + $0x10] sm:$0xff]
        %v1025 = vld [vmem:[%s1021 + $0x18] sm:$0xff]
        %v1026 = vld [vmem:[%s1021 + $0x20] sm:$0xff]
        %v1027 = vld [vmem:[%s1021 + $0x28] sm:$0xff]
        %v1028 = vld [vmem:[%s1021 + $0x30] sm:$0xff]
        %v1029 = vld [vmem:[%s1021 + $0x38] sm:$0xff]
        %v1030 = vld [vmem:[%s1021 + $0x40] sm:$0xff]
        %v1031 = vld [vmem:[%s1021 + $0x48] sm:$0xff]
        %v1032 = vld [vmem:[%s1021 + $0x50] sm:$0xff]
        %v1033 = vld [vmem:[%s1021 + $0x58] sm:$0xff]
        %v1034 = vld [vmem:[%s1021 + $0x60] sm:$0xff]
        %v1035 = vld [vmem:[%s1021 + $0x68] sm:$0xff]
        %v1036 = vld [vmem:[%s1021 + $0x70] sm:$0xff]
        %v1037 = vld [vmem:[%s1021 + $0x78] sm:$0xff]
        %v1038 = vld [vmem:[%s1021 + $0x80] sm:$0xff]
        %v1039 = vld [vmem:[%s1021 + $0x88] sm:$0xff]
        %v1040 = vld [vmem:[%s1021 + $0x90] sm:$0xff]
        %v1041 = vld [vmem:[%s1021 + $0x98] sm:$0xff]
        %v1042 = vld [vmem:[%s1021 + $0xa0] sm:$0xff]
        %v1043 = vld [vmem:[%s1021 + $0xa8] sm:$0xff]
        %v1044 = vld [vmem:[%s1021 + $0xb0] sm:$0xff]
        %v1045 = vld [vmem:[%s1021 + $0xb8] sm:$0xff]
        %v1046 = vld [vmem:[%s1021 + $0xc0] sm:$0xff]
        %v1047 = vld [vmem:[%s1021 + $0xc8] sm:$0xff]
        %v1048 = vld [vmem:[%s1021 + $0xd0] sm:$0xff]
        %v1049 = vld [vmem:[%s1021 + $0xd8] sm:$0xff]
        %v1050 = vld [vmem:[%s1021 + $0xe0] sm:$0xff]
        %v1051 = vld [vmem:[%s1021 + $0xe8] sm:$0xff]
        %v1052 = vld [vmem:[%s1021 + $0xf0] sm:$0xff]
        %v1053 = vld [vmem:[%s1021 + $0xf8] sm:$0xff]
        %v1054 = vld [vmem:[%s1021 + $0x100] sm:$0xff]
        %v1055 = vld [vmem:[%s1021 + $0x108] sm:$0xff]
        %v1056 = vld [vmem:[%s1021 + $0x110] sm:$0xff]
        %v1057 = vld [vmem:[%s1021 + $0x118] sm:$0xff]
        %v1058 = vld [vmem:[%s1021 + $0x120] sm:$0xff]
        %v1059 = vld [vmem:[%s1021 + $0x128] sm:$0xff]
        %v1060 = vld [vmem:[%s1021 + $0x130] sm:$0xff]
        %v1061 = vld [vmem:[%s1021 + $0x138] sm:$0xff]
        %v1062 = vld [vmem:[%s1021 + $0x140] sm:$0xff]
        %v1063 = vld [vmem:[%s1021 + $0x148] sm:$0xff]
        %v1064 = vld [vmem:[%s1021 + $0x150] sm:$0xff]
        %v1065 = vld [vmem:[%s1021 + $0x158] sm:$0xff]
        %v1066 = vld [vmem:[%s1021 + $0x160] sm:$0xff]
        %v1067 = vld [vmem:[%s1021 + $0x168] sm:$0xff]
        %v1068 = vld [vmem:[%s1021 + $0x170] sm:$0xff]
        %v1069 = vld [vmem:[%s1021 + $0x178] sm:$0xff]
        %v1070 = vld [vmem:[%s1021 + $0x180] sm:$0xff]
        %v1071 = vld [vmem:[%s1021 + $0x188] sm:$0xff]
        %v1072 = vld [vmem:[%s1021 + $0x190] sm:$0xff]
        %v1073 = vld [vmem:[%s1021 + $0x198] sm:$0xff]
        %v1074 = vld [vmem:[%s1021 + $0x1a0] sm:$0xff]
        %v1075 = vld [vmem:[%s1021 + $0x1a8] sm:$0xff]
        %v1076 = vld [vmem:[%s1021 + $0x1b0] sm:$0xff]
        %v1077 = vld [vmem:[%s1021 + $0x1b8] sm:$0xff]
        %v1078 = vld [vmem:[%s1021 + $0x1c0] sm:$0xff]
        %v1079 = vld [vmem:[%s1021 + $0x1c8] sm:$0xff]
        %v1080 = vld [vmem:[%s1021 + $0x1d0] sm:$0xff]
        %v1081 = vld [vmem:[%s1021 + $0x1d8] sm:$0xff]
        %v1082 = vld [vmem:[%s1021 + $0x1e0] sm:$0xff]
        %v1083 = vld [vmem:[%s1021 + $0x1e8] sm:$0xff]
        %v1084 = vld [vmem:[%s1021 + $0x1f0] sm:$0xff]
        %v1085 = vld [vmem:[%s1021 + $0x1f8] sm:$0xff]
        %v1086 = vmax.f32 %v1022, %v1023
        %1087 = vmax.xlane.f32.xlu0 %v1086
        %v1088 = vpop.xlane.xlu0 %1087
        %v1089 = vmax.f32 %v1024, %v1025
        %1090 = vmax.xlane.f32.xlu0 %v1089
        %v1091 = vpop.xlane.xlu0 %1090
        %v1092 = vmax.f32 %v1026, %v1027
        %1093 = vmax.xlane.f32.xlu0 %v1092
        %v1094 = vpop.xlane.xlu0 %1093
        %v1095 = vmax.f32 %v1028, %v1029
        %1096 = vmax.xlane.f32.xlu0 %v1095
        %v1097 = vpop.xlane.xlu0 %1096
        %v1098 = vmax.f32 %v1030, %v1031
        %1099 = vmax.xlane.f32.xlu0 %v1098
        %v1100 = vpop.xlane.xlu0 %1099
        %v1101 = vmax.f32 %v1032, %v1033
        %1102 = vmax.xlane.f32.xlu0 %v1101
        %v1103 = vpop.xlane.xlu0 %1102
        %v1104 = vmax.f32 %v1034, %v1035
        %1105 = vmax.xlane.f32.xlu0 %v1104
        %v1106 = vpop.xlane.xlu0 %1105
        %v1107 = vmax.f32 %v1036, %v1037
        %1108 = vmax.xlane.f32.xlu0 %v1107
        %v1109 = vpop.xlane.xlu0 %1108
        %v1110 = vmax.f32 %v1038, %v1039
        %1111 = vmax.xlane.f32.xlu0 %v1110
        %v1112 = vpop.xlane.xlu0 %1111
        %v1113 = vmax.f32 %v1040, %v1041
        %1114 = vmax.xlane.f32.xlu0 %v1113
        %v1115 = vpop.xlane.xlu0 %1114
        %v1116 = vmax.f32 %v1042, %v1043
        %1117 = vmax.xlane.f32.xlu0 %v1116
        %v1118 = vpop.xlane.xlu0 %1117
        %v1119 = vmax.f32 %v1044, %v1045
        %1120 = vmax.xlane.f32.xlu0 %v1119
        %v1121 = vpop.xlane.xlu0 %1120
        %v1122 = vmax.f32 %v1046, %v1047
        %1123 = vmax.xlane.f32.xlu0 %v1122
        %v1124 = vpop.xlane.xlu0 %1123
        %v1125 = vmax.f32 %v1048, %v1049
        %1126 = vmax.xlane.f32.xlu0 %v1125
        %v1127 = vpop.xlane.xlu0 %1126
        %v1128 = vmax.f32 %v1050, %v1051
        %1129 = vmax.xlane.f32.xlu0 %v1128
        %v1130 = vpop.xlane.xlu0 %1129
        %v1131 = vmax.f32 %v1052, %v1053
        %1132 = vmax.xlane.f32.xlu0 %v1131
        %v1133 = vpop.xlane.xlu0 %1132
        %v1134 = vmax.f32 %v1054, %v1055
        %1135 = vmax.xlane.f32.xlu0 %v1134
        %v1136 = vpop.xlane.xlu0 %1135
        %v1137 = vmax.f32 %v1056, %v1057
        %1138 = vmax.xlane.f32.xlu0 %v1137
        %v1139 = vpop.xlane.xlu0 %1138
        %v1140 = vmax.f32 %v1058, %v1059
        %1141 = vmax.xlane.f32.xlu0 %v1140
        %v1142 = vpop.xlane.xlu0 %1141
        %v1143 = vmax.f32 %v1060, %v1061
        %1144 = vmax.xlane.f32.xlu0 %v1143
        %v1145 = vpop.xlane.xlu0 %1144
        %v1146 = vmax.f32 %v1062, %v1063
        %1147 = vmax.xlane.f32.xlu0 %v1146
        %v1148 = vpop.xlane.xlu0 %1147
        %v1149 = vmax.f32 %v1064, %v1065
        %1150 = vmax.xlane.f32.xlu0 %v1149
        %v1151 = vpop.xlane.xlu0 %1150
        %v1152 = vmax.f32 %v1066, %v1067
        %1153 = vmax.xlane.f32.xlu0 %v1152
        %v1154 = vpop.xlane.xlu0 %1153
        %v1155 = vmax.f32 %v1068, %v1069
        %1156 = vmax.xlane.f32.xlu0 %v1155
        %v1157 = vpop.xlane.xlu0 %1156
        %v1158 = vmax.f32 %v1070, %v1071
        %1159 = vmax.xlane.f32.xlu0 %v1158
        %v1160 = vpop.xlane.xlu0 %1159
        %v1161 = vmax.f32 %v1072, %v1073
        %1162 = vmax.xlane.f32.xlu0 %v1161
        %v1163 = vpop.xlane.xlu0 %1162
        %v1164 = vmax.f32 %v1074, %v1075
        %1165 = vmax.xlane.f32.xlu0 %v1164
        %v1166 = vpop.xlane.xlu0 %1165
        %v1167 = vmax.f32 %v1076, %v1077
        %1168 = vmax.xlane.f32.xlu0 %v1167
        %v1169 = vpop.xlane.xlu0 %1168
        %v1170 = vmax.f32 %v1078, %v1079
        %1171 = vmax.xlane.f32.xlu0 %v1170
        %v1172 = vpop.xlane.xlu0 %1171
        %v1173 = vmax.f32 %v1080, %v1081
        %1174 = vmax.xlane.f32.xlu0 %v1173
        %v1175 = vpop.xlane.xlu0 %1174
        %v1176 = vmax.f32 %v1082, %v1083
        %1177 = vmax.xlane.f32.xlu0 %v1176
        %v1178 = vpop.xlane.xlu0 %1177
        %v1179 = vmax.f32 %v1084, %v1085
        %1180 = vmax.xlane.f32.xlu0 %v1179
        %v1181 = vpop.xlane.xlu0 %1180
        %v1182 = vsub.f32 %v1022, %v1088
        %v1183 = vsub.f32 %v1023, %v1088
        %v1184 = vsub.f32 %v1024, %v1091
        %v1185 = vsub.f32 %v1025, %v1091
        %v1186 = vsub.f32 %v1026, %v1094
        %v1187 = vsub.f32 %v1027, %v1094
        %v1188 = vsub.f32 %v1028, %v1097
        %v1189 = vsub.f32 %v1029, %v1097
        %v1190 = vsub.f32 %v1030, %v1100
        %v1191 = vsub.f32 %v1031, %v1100
        %v1192 = vsub.f32 %v1032, %v1103
        %v1193 = vsub.f32 %v1033, %v1103
        %v1194 = vsub.f32 %v1034, %v1106
        %v1195 = vsub.f32 %v1035, %v1106
        %v1196 = vsub.f32 %v1036, %v1109
        %v1197 = vsub.f32 %v1037, %v1109
        %v1198 = vsub.f32 %v1038, %v1112
        %v1199 = vsub.f32 %v1039, %v1112
        %v1200 = vsub.f32 %v1040, %v1115
        %v1201 = vsub.f32 %v1041, %v1115
        %v1202 = vsub.f32 %v1042, %v1118
        %v1203 = vsub.f32 %v1043, %v1118
        %v1204 = vsub.f32 %v1044, %v1121
        %v1205 = vsub.f32 %v1045, %v1121
        %v1206 = vsub.f32 %v1046, %v1124
        %v1207 = vsub.f32 %v1047, %v1124
        %v1208 = vsub.f32 %v1048, %v1127
        %v1209 = vsub.f32 %v1049, %v1127
        %v1210 = vsub.f32 %v1050, %v1130
        %v1211 = vsub.f32 %v1051, %v1130
        %v1212 = vsub.f32 %v1052, %v1133
        %v1213 = vsub.f32 %v1053, %v1133
        %v1214 = vsub.f32 %v1054, %v1136
        %v1215 = vsub.f32 %v1055, %v1136
        %v1216 = vsub.f32 %v1056, %v1139
        %v1217 = vsub.f32 %v1057, %v1139
        %v1218 = vsub.f32 %v1058, %v1142
        %v1219 = vsub.f32 %v1059, %v1142
        %v1220 = vsub.f32 %v1060, %v1145
        %v1221 = vsub.f32 %v1061, %v1145
        %v1222 = vsub.f32 %v1062, %v1148
        %v1223 = vsub.f32 %v1063, %v1148
        %v1224 = vsub.f32 %v1064, %v1151
        %v1225 = vsub.f32 %v1065, %v1151
        %v1226 = vsub.f32 %v1066, %v1154
        %v1227 = vsub.f32 %v1067, %v1154
        %v1228 = vsub.f32 %v1068, %v1157
        %v1229 = vsub.f32 %v1069, %v1157
        %v1230 = vsub.f32 %v1070, %v1160
        %v1231 = vsub.f32 %v1071, %v1160
        %v1232 = vsub.f32 %v1072, %v1163
        %v1233 = vsub.f32 %v1073, %v1163
        %v1234 = vsub.f32 %v1074, %v1166
        %v1235 = vsub.f32 %v1075, %v1166
        %v1236 = vsub.f32 %v1076, %v1169
        %v1237 = vsub.f32 %v1077, %v1169
        %v1238 = vsub.f32 %v1078, %v1172
        %v1239 = vsub.f32 %v1079, %v1172
        %v1240 = vsub.f32 %v1080, %v1175
        %v1241 = vsub.f32 %v1081, %v1175
        %v1242 = vsub.f32 %v1082, %v1178
        %v1243 = vsub.f32 %v1083, %v1178
        %v1244 = vsub.f32 %v1084, %v1181
        %v1245 = vsub.f32 %v1085, %v1181
        %v1246 = vmul.f32 %v1182, 1.442695
        %v1247 = vpow.pop %v1246
        %v1248 = vmul.f32 %v1183, 1.442695
        %v1249 = vpow.pop %v1248
        %v1250 = vmul.f32 %v1184, 1.442695
        %v1251 = vpow.pop %v1250
        %v1252 = vmul.f32 %v1185, 1.442695
        %v1253 = vpow.pop %v1252
        %v1254 = vmul.f32 %v1186, 1.442695
        %v1255 = vpow.pop %v1254
        %v1256 = vmul.f32 %v1187, 1.442695
        %v1257 = vpow.pop %v1256
        %v1258 = vmul.f32 %v1188, 1.442695
        %v1259 = vpow.pop %v1258
        %v1260 = vmul.f32 %v1189, 1.442695
        %v1261 = vpow.pop %v1260
        %v1262 = vmul.f32 %v1190, 1.442695
        %v1263 = vpow.pop %v1262
        %v1264 = vmul.f32 %v1191, 1.442695
        %v1265 = vpow.pop %v1264
        %v1266 = vmul.f32 %v1192, 1.442695
        %v1267 = vpow.pop %v1266
        %v1268 = vmul.f32 %v1193, 1.442695
        %v1269 = vpow.pop %v1268
        %v1270 = vmul.f32 %v1194, 1.442695
        %v1271 = vpow.pop %v1270
        %v1272 = vmul.f32 %v1195, 1.442695
        %v1273 = vpow.pop %v1272
        %v1274 = vmul.f32 %v1196, 1.442695
        %v1275 = vpow.pop %v1274
        %v1276 = vmul.f32 %v1197, 1.442695
        %v1277 = vpow.pop %v1276
        %v1278 = vmul.f32 %v1198, 1.442695
        %v1279 = vpow.pop %v1278
        %v1280 = vmul.f32 %v1199, 1.442695
        %v1281 = vpow.pop %v1280
        %v1282 = vmul.f32 %v1200, 1.442695
        %v1283 = vpow.pop %v1282
        %v1284 = vmul.f32 %v1201, 1.442695
        %v1285 = vpow.pop %v1284
        %v1286 = vmul.f32 %v1202, 1.442695
        %v1287 = vpow.pop %v1286
        %v1288 = vmul.f32 %v1203, 1.442695
        %v1289 = vpow.pop %v1288
        %v1290 = vmul.f32 %v1204, 1.442695
        %v1291 = vpow.pop %v1290
        %v1292 = vmul.f32 %v1205, 1.442695
        %v1293 = vpow.pop %v1292
        %v1294 = vmul.f32 %v1206, 1.442695
        %v1295 = vpow.pop %v1294
        %v1296 = vmul.f32 %v1207, 1.442695
        %v1297 = vpow.pop %v1296
        %v1298 = vmul.f32 %v1208, 1.442695
        %v1299 = vpow.pop %v1298
        %v1300 = vmul.f32 %v1209, 1.442695
        %v1301 = vpow.pop %v1300
        %v1302 = vmul.f32 %v1210, 1.442695
        %v1303 = vpow.pop %v1302
        %v1304 = vmul.f32 %v1211, 1.442695
        %v1305 = vpow.pop %v1304
        %v1306 = vmul.f32 %v1212, 1.442695
        %v1307 = vpow.pop %v1306
        %v1308 = vmul.f32 %v1213, 1.442695
        %v1309 = vpow.pop %v1308
        %v1310 = vmul.f32 %v1214, 1.442695
        %v1311 = vpow.pop %v1310
        %v1312 = vmul.f32 %v1215, 1.442695
        %v1313 = vpow.pop %v1312
        %v1314 = vmul.f32 %v1216, 1.442695
        %v1315 = vpow.pop %v1314
        %v1316 = vmul.f32 %v1217, 1.442695
        %v1317 = vpow.pop %v1316
        %v1318 = vmul.f32 %v1218, 1.442695
        %v1319 = vpow.pop %v1318
        %v1320 = vmul.f32 %v1219, 1.442695
        %v1321 = vpow.pop %v1320
        %v1322 = vmul.f32 %v1220, 1.442695
        %v1323 = vpow.pop %v1322
        %v1324 = vmul.f32 %v1221, 1.442695
        %v1325 = vpow.pop %v1324
        %v1326 = vmul.f32 %v1222, 1.442695
        %v1327 = vpow.pop %v1326
        %v1328 = vmul.f32 %v1223, 1.442695
        %v1329 = vpow.pop %v1328
        %v1330 = vmul.f32 %v1224, 1.442695
        %v1331 = vpow.pop %v1330
        %v1332 = vmul.f32 %v1225, 1.442695
        %v1333 = vpow.pop %v1332
        %v1334 = vmul.f32 %v1226, 1.442695
        %v1335 = vpow.pop %v1334
        %v1336 = vmul.f32 %v1227, 1.442695
        %v1337 = vpow.pop %v1336
        %v1338 = vmul.f32 %v1228, 1.442695
        %v1339 = vpow.pop %v1338
        %v1340 = vmul.f32 %v1229, 1.442695
        %v1341 = vpow.pop %v1340
        %v1342 = vmul.f32 %v1230, 1.442695
        %v1343 = vpow.pop %v1342
        %v1344 = vmul.f32 %v1231, 1.442695
        %v1345 = vpow.pop %v1344
        %v1346 = vmul.f32 %v1232, 1.442695
        %v1347 = vpow.pop %v1346
        %v1348 = vmul.f32 %v1233, 1.442695
        %v1349 = vpow.pop %v1348
        %v1350 = vmul.f32 %v1234, 1.442695
        %v1351 = vpow.pop %v1350
        %v1352 = vmul.f32 %v1235, 1.442695
        %v1353 = vpow.pop %v1352
        %v1354 = vmul.f32 %v1236, 1.442695
        %v1355 = vpow.pop %v1354
        %v1356 = vmul.f32 %v1237, 1.442695
        %v1357 = vpow.pop %v1356
        %v1358 = vmul.f32 %v1238, 1.442695
        %v1359 = vpow.pop %v1358
        %v1360 = vmul.f32 %v1239, 1.442695
        %v1361 = vpow.pop %v1360
        %v1362 = vmul.f32 %v1240, 1.442695
        %v1363 = vpow.pop %v1362
        %v1364 = vmul.f32 %v1241, 1.442695
        %v1365 = vpow.pop %v1364
        %v1366 = vmul.f32 %v1242, 1.442695
        %v1367 = vpow.pop %v1366
        %v1368 = vmul.f32 %v1243, 1.442695
        %v1369 = vpow.pop %v1368
        %v1370 = vmul.f32 %v1244, 1.442695
        %v1371 = vpow.pop %v1370
        %v1372 = vmul.f32 %v1245, 1.442695
        %v1373 = vpow.pop %v1372
        %v1374 = vpack.c.bf16 %v1251, %v1247
        %v1375 = vpack.c.bf16 %v1253, %v1249
        %v1376 = vpack.c.bf16 %v1259, %v1255
        %v1377 = vpack.c.bf16 %v1261, %v1257
        %v1378 = vpack.c.bf16 %v1267, %v1263
        %v1379 = vpack.c.bf16 %v1269, %v1265
        %v1380 = vpack.c.bf16 %v1275, %v1271
        %v1381 = vpack.c.bf16 %v1277, %v1273
        %v1382 = vpack.c.bf16 %v1283, %v1279
        %v1383 = vpack.c.bf16 %v1285, %v1281
        %v1384 = vpack.c.bf16 %v1291, %v1287
        %v1385 = vpack.c.bf16 %v1293, %v1289
        %v1386 = vpack.c.bf16 %v1299, %v1295
        %v1387 = vpack.c.bf16 %v1301, %v1297
        %v1388 = vpack.c.bf16 %v1307, %v1303
        %v1389 = vpack.c.bf16 %v1309, %v1305
        %v1390 = vpack.c.bf16 %v1315, %v1311
        %v1391 = vpack.c.bf16 %v1317, %v1313
        %v1392 = vpack.c.bf16 %v1323, %v1319
        %v1393 = vpack.c.bf16 %v1325, %v1321
        %v1394 = vpack.c.bf16 %v1331, %v1327
        %v1395 = vpack.c.bf16 %v1333, %v1329
        %v1396 = vpack.c.bf16 %v1339, %v1335
        %v1397 = vpack.c.bf16 %v1341, %v1337
        %v1398 = vpack.c.bf16 %v1347, %v1343
        %v1399 = vpack.c.bf16 %v1349, %v1345
        %v1400 = vpack.c.bf16 %v1355, %v1351
        %v1401 = vpack.c.bf16 %v1357, %v1353
        %v1402 = vpack.c.bf16 %v1363, %v1359
        %v1403 = vpack.c.bf16 %v1365, %v1361
        %v1404 = vpack.c.bf16 %v1371, %v1367
        %v1405 = vpack.c.bf16 %v1373, %v1369
        %v1406 = vunpack.c.l.bf16 %v1374
        %v1407 = vunpack.c.l.bf16 %v1375
        %v1408 = vunpack.c.h.bf16 %v1374
        %v1409 = vunpack.c.h.bf16 %v1375
        %v1410 = vunpack.c.l.bf16 %v1376
        %v1411 = vunpack.c.l.bf16 %v1377
        %v1412 = vunpack.c.h.bf16 %v1376
        %v1413 = vunpack.c.h.bf16 %v1377
        %v1414 = vunpack.c.l.bf16 %v1378
        %v1415 = vunpack.c.l.bf16 %v1379
        %v1416 = vunpack.c.h.bf16 %v1378
        %v1417 = vunpack.c.h.bf16 %v1379
        %v1418 = vunpack.c.l.bf16 %v1380
        %v1419 = vunpack.c.l.bf16 %v1381
        %v1420 = vunpack.c.h.bf16 %v1380
        %v1421 = vunpack.c.h.bf16 %v1381
        %v1422 = vunpack.c.l.bf16 %v1382
        %v1423 = vunpack.c.l.bf16 %v1383
        %v1424 = vunpack.c.h.bf16 %v1382
        %v1425 = vunpack.c.h.bf16 %v1383
        %v1426 = vunpack.c.l.bf16 %v1384
        %v1427 = vunpack.c.l.bf16 %v1385
        %v1428 = vunpack.c.h.bf16 %v1384
        %v1429 = vunpack.c.h.bf16 %v1385
        %v1430 = vunpack.c.l.bf16 %v1386
        %v1431 = vunpack.c.l.bf16 %v1387
        %v1432 = vunpack.c.h.bf16 %v1386
        %v1433 = vunpack.c.h.bf16 %v1387
        %v1434 = vunpack.c.l.bf16 %v1388
        %v1435 = vunpack.c.l.bf16 %v1389
        %v1436 = vunpack.c.h.bf16 %v1388
        %v1437 = vunpack.c.h.bf16 %v1389
        %v1438 = vunpack.c.l.bf16 %v1390
        %v1439 = vunpack.c.l.bf16 %v1391
        %v1440 = vunpack.c.h.bf16 %v1390
        %v1441 = vunpack.c.h.bf16 %v1391
        %v1442 = vunpack.c.l.bf16 %v1392
        %v1443 = vunpack.c.l.bf16 %v1393
        %v1444 = vunpack.c.h.bf16 %v1392
        %v1445 = vunpack.c.h.bf16 %v1393
        %v1446 = vunpack.c.l.bf16 %v1394
        %v1447 = vunpack.c.l.bf16 %v1395
        %v1448 = vunpack.c.h.bf16 %v1394
        %v1449 = vunpack.c.h.bf16 %v1395
        %v1450 = vunpack.c.l.bf16 %v1396
        %v1451 = vunpack.c.l.bf16 %v1397
        %v1452 = vunpack.c.h.bf16 %v1396
        %v1453 = vunpack.c.h.bf16 %v1397
        %v1454 = vunpack.c.l.bf16 %v1398
        %v1455 = vunpack.c.l.bf16 %v1399
        %v1456 = vunpack.c.h.bf16 %v1398
        %v1457 = vunpack.c.h.bf16 %v1399
        %v1458 = vunpack.c.l.bf16 %v1400
        %v1459 = vunpack.c.l.bf16 %v1401
        %v1460 = vunpack.c.h.bf16 %v1400
        %v1461 = vunpack.c.h.bf16 %v1401
        %v1462 = vunpack.c.l.bf16 %v1402
        %v1463 = vunpack.c.l.bf16 %v1403
        %v1464 = vunpack.c.h.bf16 %v1402
        %v1465 = vunpack.c.h.bf16 %v1403
        %v1466 = vunpack.c.l.bf16 %v1404
        %v1467 = vunpack.c.l.bf16 %v1405
        %v1468 = vunpack.c.h.bf16 %v1404
        %v1469 = vunpack.c.h.bf16 %v1405
        %v1470 = vadd.f32 %v1406, %v1407
        %1471 = vadd.xlane.f32.xlu0 %v1470
        %v1472 = vpop.xlane.xlu0 %1471
        %v1473 = vadd.f32 %v1408, %v1409
        %1474 = vadd.xlane.f32.xlu0 %v1473
        %v1475 = vpop.xlane.xlu0 %1474
        %v1476 = vadd.f32 %v1410, %v1411
        %1477 = vadd.xlane.f32.xlu0 %v1476
        %v1478 = vpop.xlane.xlu0 %1477
        %v1479 = vadd.f32 %v1412, %v1413
        %1480 = vadd.xlane.f32.xlu0 %v1479
        %v1481 = vpop.xlane.xlu0 %1480
        %v1482 = vadd.f32 %v1414, %v1415
        %1483 = vadd.xlane.f32.xlu0 %v1482
        %v1484 = vpop.xlane.xlu0 %1483
        %v1485 = vadd.f32 %v1416, %v1417
        %1486 = vadd.xlane.f32.xlu0 %v1485
        %v1487 = vpop.xlane.xlu0 %1486
        %v1488 = vadd.f32 %v1418, %v1419
        %1489 = vadd.xlane.f32.xlu0 %v1488
        %v1490 = vpop.xlane.xlu0 %1489
        %v1491 = vadd.f32 %v1420, %v1421
        %1492 = vadd.xlane.f32.xlu0 %v1491
        %v1493 = vpop.xlane.xlu0 %1492
        %v1494 = vadd.f32 %v1422, %v1423
        %1495 = vadd.xlane.f32.xlu0 %v1494
        %v1496 = vpop.xlane.xlu0 %1495
        %v1497 = vadd.f32 %v1424, %v1425
        %1498 = vadd.xlane.f32.xlu0 %v1497
        %v1499 = vpop.xlane.xlu0 %1498
        %v1500 = vadd.f32 %v1426, %v1427
        %1501 = vadd.xlane.f32.xlu0 %v1500
        %v1502 = vpop.xlane.xlu0 %1501
        %v1503 = vadd.f32 %v1428, %v1429
        %1504 = vadd.xlane.f32.xlu0 %v1503
        %v1505 = vpop.xlane.xlu0 %1504
        %v1506 = vadd.f32 %v1430, %v1431
        %1507 = vadd.xlane.f32.xlu0 %v1506
        %v1508 = vpop.xlane.xlu0 %1507
        %v1509 = vadd.f32 %v1432, %v1433
        %1510 = vadd.xlane.f32.xlu0 %v1509
        %v1511 = vpop.xlane.xlu0 %1510
        %v1512 = vadd.f32 %v1434, %v1435
        %1513 = vadd.xlane.f32.xlu0 %v1512
        %v1514 = vpop.xlane.xlu0 %1513
        %v1515 = vadd.f32 %v1436, %v1437
        %1516 = vadd.xlane.f32.xlu0 %v1515
        %v1517 = vpop.xlane.xlu0 %1516
        %v1518 = vadd.f32 %v1438, %v1439
        %1519 = vadd.xlane.f32.xlu0 %v1518
        %v1520 = vpop.xlane.xlu0 %1519
        %v1521 = vadd.f32 %v1440, %v1441
        %1522 = vadd.xlane.f32.xlu0 %v1521
        %v1523 = vpop.xlane.xlu0 %1522
        %v1524 = vadd.f32 %v1442, %v1443
        %1525 = vadd.xlane.f32.xlu0 %v1524
        %v1526 = vpop.xlane.xlu0 %1525
        %v1527 = vadd.f32 %v1444, %v1445
        %1528 = vadd.xlane.f32.xlu0 %v1527
        %v1529 = vpop.xlane.xlu0 %1528
        %v1530 = vadd.f32 %v1446, %v1447
        %1531 = vadd.xlane.f32.xlu0 %v1530
        %v1532 = vpop.xlane.xlu0 %1531
        %v1533 = vadd.f32 %v1448, %v1449
        %1534 = vadd.xlane.f32.xlu0 %v1533
        %v1535 = vpop.xlane.xlu0 %1534
        %v1536 = vadd.f32 %v1450, %v1451
        %1537 = vadd.xlane.f32.xlu0 %v1536
        %v1538 = vpop.xlane.xlu0 %1537
        %v1539 = vadd.f32 %v1452, %v1453
        %1540 = vadd.xlane.f32.xlu0 %v1539
        %v1541 = vpop.xlane.xlu0 %1540
        %v1542 = vadd.f32 %v1454, %v1455
        %1543 = vadd.xlane.f32.xlu0 %v1542
        %v1544 = vpop.xlane.xlu0 %1543
        %v1545 = vadd.f32 %v1456, %v1457
        %1546 = vadd.xlane.f32.xlu0 %v1545
        %v1547 = vpop.xlane.xlu0 %1546
        %v1548 = vadd.f32 %v1458, %v1459
        %1549 = vadd.xlane.f32.xlu0 %v1548
        %v1550 = vpop.xlane.xlu0 %1549
        %v1551 = vadd.f32 %v1460, %v1461
        %1552 = vadd.xlane.f32.xlu0 %v1551
        %v1553 = vpop.xlane.xlu0 %1552
        %v1554 = vadd.f32 %v1462, %v1463
        %1555 = vadd.xlane.f32.xlu0 %v1554
        %v1556 = vpop.xlane.xlu0 %1555
        %v1557 = vadd.f32 %v1464, %v1465
        %1558 = vadd.xlane.f32.xlu0 %v1557
        %v1559 = vpop.xlane.xlu0 %1558
        %v1560 = vadd.f32 %v1466, %v1467
        %1561 = vadd.xlane.f32.xlu0 %v1560
        %v1562 = vpop.xlane.xlu0 %1561
        %v1563 = vadd.f32 %v1468, %v1469
        %1564 = vadd.xlane.f32.xlu0 %v1563
        %v1565 = vpop.xlane.xlu0 %1564
        %s1566 = scalar_lea.vmem %s201, 256
        %v1567 = vld [vmem:[%s1566] sm:$0xff]
        %v1568 = vld [vmem:[%s1566 + $0x8] sm:$0xff]
        %v1569 = vld [vmem:[%s1566 + $0x10] sm:$0xff]
        %v1570 = vld [vmem:[%s1566 + $0x18] sm:$0xff]
        %v1571 = vld [vmem:[%s1566 + $0x20] sm:$0xff]
        %v1572 = vld [vmem:[%s1566 + $0x28] sm:$0xff]
        %v1573 = vld [vmem:[%s1566 + $0x30] sm:$0xff]
        %v1574 = vld [vmem:[%s1566 + $0x38] sm:$0xff]
        %v1575 = vld [vmem:[%s1566 + $0x40] sm:$0xff]
        %v1576 = vld [vmem:[%s1566 + $0x48] sm:$0xff]
        %v1577 = vld [vmem:[%s1566 + $0x50] sm:$0xff]
        %v1578 = vld [vmem:[%s1566 + $0x58] sm:$0xff]
        %v1579 = vld [vmem:[%s1566 + $0x60] sm:$0xff]
        %v1580 = vld [vmem:[%s1566 + $0x68] sm:$0xff]
        %v1581 = vld [vmem:[%s1566 + $0x70] sm:$0xff]
        %v1582 = vld [vmem:[%s1566 + $0x78] sm:$0xff]
        %v1583 = vld [vmem:[%s1566 + $0x80] sm:$0xff]
        %v1584 = vld [vmem:[%s1566 + $0x88] sm:$0xff]
        %v1585 = vld [vmem:[%s1566 + $0x90] sm:$0xff]
        %v1586 = vld [vmem:[%s1566 + $0x98] sm:$0xff]
        %v1587 = vld [vmem:[%s1566 + $0xa0] sm:$0xff]
        %v1588 = vld [vmem:[%s1566 + $0xa8] sm:$0xff]
        %v1589 = vld [vmem:[%s1566 + $0xb0] sm:$0xff]
        %v1590 = vld [vmem:[%s1566 + $0xb8] sm:$0xff]
        %v1591 = vld [vmem:[%s1566 + $0xc0] sm:$0xff]
        %v1592 = vld [vmem:[%s1566 + $0xc8] sm:$0xff]
        %v1593 = vld [vmem:[%s1566 + $0xd0] sm:$0xff]
        %v1594 = vld [vmem:[%s1566 + $0xd8] sm:$0xff]
        %v1595 = vld [vmem:[%s1566 + $0xe0] sm:$0xff]
        %v1596 = vld [vmem:[%s1566 + $0xe8] sm:$0xff]
        %v1597 = vld [vmem:[%s1566 + $0xf0] sm:$0xff]
        %v1598 = vld [vmem:[%s1566 + $0xf8] sm:$0xff]
        %v1599 = vpack.c.bf16 %v1568, %v1567
        %v1600 = vpack.c.bf16 %v1570, %v1569
        %v1601 = vpack.c.bf16 %v1572, %v1571
        %v1602 = vpack.c.bf16 %v1574, %v1573
        %v1603 = vpack.c.bf16 %v1576, %v1575
        %v1604 = vpack.c.bf16 %v1578, %v1577
        %v1605 = vpack.c.bf16 %v1580, %v1579
        %v1606 = vpack.c.bf16 %v1582, %v1581
        %v1607 = vpack.c.bf16 %v1584, %v1583
        %v1608 = vpack.c.bf16 %v1586, %v1585
        %v1609 = vpack.c.bf16 %v1588, %v1587
        %v1610 = vpack.c.bf16 %v1590, %v1589
        %v1611 = vpack.c.bf16 %v1592, %v1591
        %v1612 = vpack.c.bf16 %v1594, %v1593
        %v1613 = vpack.c.bf16 %v1596, %v1595
        %v1614 = vpack.c.bf16 %v1598, %v1597
        %1615 = vmatprep.subr.bf16.mxu0 0
        %1616 = vmatpush1.bf16.msra.mxu0 %v1599
        %1617 = vmatprep.subr.bf16.mxu0 0
        %1618 = vmatpush1.bf16.msra.mxu0 %v1600
        %1619 = vmatprep.subr.bf16.mxu0 0
        %1620 = vmatpush1.bf16.msra.mxu0 %v1601
        %1621 = vmatprep.subr.bf16.mxu0 0
        %1622 = vmatpush1.bf16.msra.mxu0 %v1602
        %1623 = vmatprep.subr.bf16.mxu0 0
        %1624 = vmatpush1.bf16.msra.mxu0 %v1603
        %1625 = vmatprep.subr.bf16.mxu0 0
        %1626 = vmatpush1.bf16.msra.mxu0 %v1604
        %1627 = vmatprep.subr.bf16.mxu0 0
        %1628 = vmatpush1.bf16.msra.mxu0 %v1605
        %1629 = vmatprep.subr.bf16.mxu0 0
        %1630 = vmatpush1.bf16.msra.mxu0 %v1606
        %1631 = vmatprep.subr.bf16.mxu0 0
        %1632 = vmatpush1.bf16.msra.mxu0 %v1607
        %1633 = vmatprep.subr.bf16.mxu0 0
        %1634 = vmatpush1.bf16.msra.mxu0 %v1608
        %1635 = vmatprep.subr.bf16.mxu0 0
        %1636 = vmatpush1.bf16.msra.mxu0 %v1609
        %1637 = vmatprep.subr.bf16.mxu0 0
        %1638 = vmatpush1.bf16.msra.mxu0 %v1610
        %1639 = vmatprep.subr.bf16.mxu0 0
        %1640 = vmatpush1.bf16.msra.mxu0 %v1611
        %1641 = vmatprep.subr.bf16.mxu0 0
        %1642 = vmatpush1.bf16.msra.mxu0 %v1612
        %1643 = vmatprep.subr.bf16.mxu0 0
        %1644 = vmatpush1.bf16.msra.mxu0 %v1613
        %1645 = vmatprep.subr.bf16.mxu0 0
        %1646 = vmatpush1.bf16.msra.mxu0 %v1614
        %1647 = vmatprep.mubr.bf16.mxu0 %v1375
        %1648 = vmatmul.mubr.bf16.gmra.mrb[0].mxu0 %v1374
        %v1649 = vpop.f32.mrb[0].mxu0
        %v1650 = vadd.f32 0.0, %v1649
        %v1651 = vpop.f32.mrb[0].mxu0
        %v1652 = vpop.f32.mrb[0].mxu0
        %v1653 = vadd.f32 0.0, %v1652
        %v1654 = vpop.f32.mrb[0].mxu0
        %1655 = vmatprep.mubr.bf16.mxu0 %v1377
        %1656 = vmatmul.mubr.bf16.gmra.mrb[0].mxu0 %v1376
        %v1657 = vpop.f32.mrb[0].mxu0
        %v1658 = vadd.f32 0.0, %v1657
        %v1659 = vpop.f32.mrb[0].mxu0
        %v1660 = vpop.f32.mrb[0].mxu0
        %v1661 = vadd.f32 0.0, %v1660
        %v1662 = vpop.f32.mrb[0].mxu0
        %1663 = vmatprep.mubr.bf16.mxu0 %v1379
        %1664 = vmatmul.mubr.bf16.gmra.mrb[0].mxu0 %v1378
        %v1665 = vpop.f32.mrb[0].mxu0
        %v1666 = vadd.f32 0.0, %v1665
        %v1667 = vpop.f32.mrb[0].mxu0
        %v1668 = vpop.f32.mrb[0].mxu0
        %v1669 = vadd.f32 0.0, %v1668
        %v1670 = vpop.f32.mrb[0].mxu0
        %1671 = vmatprep.mubr.bf16.mxu0 %v1381
        %1672 = vmatmul.mubr.bf16.gmra.mrb[0].mxu0 %v1380
        %v1673 = vpop.f32.mrb[0].mxu0
        %v1674 = vadd.f32 0.0, %v1673
        %v1675 = vpop.f32.mrb[0].mxu0
        %v1676 = vpop.f32.mrb[0].mxu0
        %v1677 = vadd.f32 0.0, %v1676
        %v1678 = vpop.f32.mrb[0].mxu0
        %1679 = vmatprep.mubr.bf16.mxu0 %v1383
        %1680 = vmatmul.mubr.bf16.gmra.mrb[0].mxu0 %v1382
        %v1681 = vpop.f32.mrb[0].mxu0
        %v1682 = vadd.f32 0.0, %v1681
        %v1683 = vpop.f32.mrb[0].mxu0
        %v1684 = vpop.f32.mrb[0].mxu0
        %v1685 = vadd.f32 0.0, %v1684
        %v1686 = vpop.f32.mrb[0].mxu0
        %1687 = vmatprep.mubr.bf16.mxu0 %v1385
        %1688 = vmatmul.mubr.bf16.gmra.mrb[0].mxu0 %v1384
        %v1689 = vpop.f32.mrb[0].mxu0
        %v1690 = vadd.f32 0.0, %v1689
        %v1691 = vpop.f32.mrb[0].mxu0
        %v1692 = vpop.f32.mrb[0].mxu0
        %v1693 = vadd.f32 0.0, %v1692
        %v1694 = vpop.f32.mrb[0].mxu0
        %1695 = vmatprep.mubr.bf16.mxu0 %v1387
        %1696 = vmatmul.mubr.bf16.gmra.mrb[0].mxu0 %v1386
        %v1697 = vpop.f32.mrb[0].mxu0
        %v1698 = vadd.f32 0.0, %v1697
        %v1699 = vpop.f32.mrb[0].mxu0
        %v1700 = vpop.f32.mrb[0].mxu0
        %v1701 = vadd.f32 0.0, %v1700
        %v1702 = vpop.f32.mrb[0].mxu0
        %1703 = vmatprep.mubr.bf16.mxu0 %v1389
        %1704 = vmatmul.mubr.bf16.gmra.mrb[0].mxu0 %v1388
        %v1705 = vpop.f32.mrb[0].mxu0
        %v1706 = vadd.f32 0.0, %v1705
        %v1707 = vpop.f32.mrb[0].mxu0
        %v1708 = vpop.f32.mrb[0].mxu0
        %v1709 = vadd.f32 0.0, %v1708
        %v1710 = vpop.f32.mrb[0].mxu0
        %1711 = vmatprep.mubr.bf16.mxu0 %v1391
        %1712 = vmatmul.mubr.bf16.gmra.mrb[0].mxu0 %v1390
        %v1713 = vpop.f32.mrb[0].mxu0
        %v1714 = vadd.f32 0.0, %v1713
        %v1715 = vpop.f32.mrb[0].mxu0
        %v1716 = vpop.f32.mrb[0].mxu0
        %v1717 = vadd.f32 0.0, %v1716
        %v1718 = vpop.f32.mrb[0].mxu0
        %1719 = vmatprep.mubr.bf16.mxu0 %v1393
        %1720 = vmatmul.mubr.bf16.gmra.mrb[0].mxu0 %v1392
        %v1721 = vpop.f32.mrb[0].mxu0
        %v1722 = vadd.f32 0.0, %v1721
        %v1723 = vpop.f32.mrb[0].mxu0
        %v1724 = vpop.f32.mrb[0].mxu0
        %v1725 = vadd.f32 0.0, %v1724
        %v1726 = vpop.f32.mrb[0].mxu0
        %1727 = vmatprep.mubr.bf16.mxu0 %v1395
        %1728 = vmatmul.mubr.bf16.gmra.mrb[0].mxu0 %v1394
        %v1729 = vpop.f32.mrb[0].mxu0
        %v1730 = vadd.f32 0.0, %v1729
        %v1731 = vpop.f32.mrb[0].mxu0
        %v1732 = vpop.f32.mrb[0].mxu0
        %v1733 = vadd.f32 0.0, %v1732
        %v1734 = vpop.f32.mrb[0].mxu0
        %1735 = vmatprep.mubr.bf16.mxu0 %v1397
        %1736 = vmatmul.mubr.bf16.gmra.mrb[0].mxu0 %v1396
        %v1737 = vpop.f32.mrb[0].mxu0
        %v1738 = vadd.f32 0.0, %v1737
        %v1739 = vpop.f32.mrb[0].mxu0
        %v1740 = vpop.f32.mrb[0].mxu0
        %v1741 = vadd.f32 0.0, %v1740
        %v1742 = vpop.f32.mrb[0].mxu0
        %1743 = vmatprep.mubr.bf16.mxu0 %v1399
        %1744 = vmatmul.mubr.bf16.gmra.mrb[0].mxu0 %v1398
        %v1745 = vpop.f32.mrb[0].mxu0
        %v1746 = vadd.f32 0.0, %v1745
        %v1747 = vpop.f32.mrb[0].mxu0
        %v1748 = vpop.f32.mrb[0].mxu0
        %v1749 = vadd.f32 0.0, %v1748
        %v1750 = vpop.f32.mrb[0].mxu0
        %1751 = vmatprep.mubr.bf16.mxu0 %v1401
        %1752 = vmatmul.mubr.bf16.gmra.mrb[0].mxu0 %v1400
        %v1753 = vpop.f32.mrb[0].mxu0
        %v1754 = vadd.f32 0.0, %v1753
        %v1755 = vpop.f32.mrb[0].mxu0
        %v1756 = vpop.f32.mrb[0].mxu0
        %v1757 = vadd.f32 0.0, %v1756
        %v1758 = vpop.f32.mrb[0].mxu0
        %1759 = vmatprep.mubr.bf16.mxu0 %v1403
        %1760 = vmatmul.mubr.bf16.gmra.mrb[0].mxu0 %v1402
        %v1761 = vpop.f32.mrb[0].mxu0
        %v1762 = vadd.f32 0.0, %v1761
        %v1763 = vpop.f32.mrb[0].mxu0
        %v1764 = vpop.f32.mrb[0].mxu0
        %v1765 = vadd.f32 0.0, %v1764
        %v1766 = vpop.f32.mrb[0].mxu0
        %1767 = vmatprep.mubr.bf16.mxu0 %v1405
        %1768 = vmatmul.mubr.bf16.gmra.mrb[0].mxu0 %v1404
        %v1769 = vpop.f32.mrb[0].mxu0
        %v1770 = vadd.f32 0.0, %v1769
        %v1771 = vpop.f32.mrb[0].mxu0
        %v1772 = vpop.f32.mrb[0].mxu0
        %v1773 = vadd.f32 0.0, %v1772
        %v1774 = vpop.f32.mrb[0].mxu0
        %1775 = vdwg.mxu0
        %v1776 = vrcp.pop %v1472
        %v1777 = vrcp.pop %v1475
        %v1778 = vrcp.pop %v1478
        %v1779 = vrcp.pop %v1481
        %v1780 = vrcp.pop %v1484
        %v1781 = vrcp.pop %v1487
        %v1782 = vrcp.pop %v1490
        %v1783 = vrcp.pop %v1493
        %v1784 = vrcp.pop %v1496
        %v1785 = vrcp.pop %v1499
        %v1786 = vrcp.pop %v1502
        %v1787 = vrcp.pop %v1505
        %v1788 = vrcp.pop %v1508
        %v1789 = vrcp.pop %v1511
        %v1790 = vrcp.pop %v1514
        %v1791 = vrcp.pop %v1517
        %v1792 = vrcp.pop %v1520
        %v1793 = vrcp.pop %v1523
        %v1794 = vrcp.pop %v1526
        %v1795 = vrcp.pop %v1529
        %v1796 = vrcp.pop %v1532
        %v1797 = vrcp.pop %v1535
        %v1798 = vrcp.pop %v1538
        %v1799 = vrcp.pop %v1541
        %v1800 = vrcp.pop %v1544
        %v1801 = vrcp.pop %v1547
        %v1802 = vrcp.pop %v1550
        %v1803 = vrcp.pop %v1553
        %v1804 = vrcp.pop %v1556
        %v1805 = vrcp.pop %v1559
        %v1806 = vrcp.pop %v1562
        %v1807 = vrcp.pop %v1565
        %v1808 = vmul.f32 %v1650, %v1776
        %v1809 = vmul.f32 %v1653, %v1777
        %v1810 = vmul.f32 %v1658, %v1778
        %v1811 = vmul.f32 %v1661, %v1779
        %v1812 = vmul.f32 %v1666, %v1780
        %v1813 = vmul.f32 %v1669, %v1781
        %v1814 = vmul.f32 %v1674, %v1782
        %v1815 = vmul.f32 %v1677, %v1783
        %v1816 = vmul.f32 %v1682, %v1784
        %v1817 = vmul.f32 %v1685, %v1785
        %v1818 = vmul.f32 %v1690, %v1786
        %v1819 = vmul.f32 %v1693, %v1787
        %v1820 = vmul.f32 %v1698, %v1788
        %v1821 = vmul.f32 %v1701, %v1789
        %v1822 = vmul.f32 %v1706, %v1790
        %v1823 = vmul.f32 %v1709, %v1791
        %v1824 = vmul.f32 %v1714, %v1792
        %v1825 = vmul.f32 %v1717, %v1793
        %v1826 = vmul.f32 %v1722, %v1794
        %v1827 = vmul.f32 %v1725, %v1795
        %v1828 = vmul.f32 %v1730, %v1796
        %v1829 = vmul.f32 %v1733, %v1797
        %v1830 = vmul.f32 %v1738, %v1798
        %v1831 = vmul.f32 %v1741, %v1799
        %v1832 = vmul.f32 %v1746, %v1800
        %v1833 = vmul.f32 %v1749, %v1801
        %v1834 = vmul.f32 %v1754, %v1802
        %v1835 = vmul.f32 %v1757, %v1803
        %v1836 = vmul.f32 %v1762, %v1804
        %v1837 = vmul.f32 %v1765, %v1805
        %v1838 = vmul.f32 %v1770, %v1806
        %v1839 = vmul.f32 %v1773, %v1807
        %1872 = vrot.lane.b32.xlu0 %v1808, 64
        %v1873 = vpop.permute.xlu0 %1872
        %1874 = vrot.lane.b32.xlu0 %v1809, 64
        %v1875 = vpop.permute.xlu0 %1874
        %1876 = vrot.lane.b32.xlu0 %v1810, 64
        %v1877 = vpop.permute.xlu0 %1876
        %1878 = vrot.lane.b32.xlu0 %v1811, 64
        %v1879 = vpop.permute.xlu0 %1878
        %1880 = vrot.lane.b32.xlu0 %v1812, 64
        %v1881 = vpop.permute.xlu0 %1880
        %1882 = vrot.lane.b32.xlu0 %v1813, 64
        %v1883 = vpop.permute.xlu0 %1882
        %1884 = vrot.lane.b32.xlu0 %v1814, 64
        %v1885 = vpop.permute.xlu0 %1884
        %1886 = vrot.lane.b32.xlu0 %v1815, 64
        %v1887 = vpop.permute.xlu0 %1886
        %1888 = vrot.lane.b32.xlu0 %v1816, 64
        %v1889 = vpop.permute.xlu0 %1888
        %1890 = vrot.lane.b32.xlu0 %v1817, 64
        %v1891 = vpop.permute.xlu0 %1890
        %1892 = vrot.lane.b32.xlu0 %v1818, 64
        %v1893 = vpop.permute.xlu0 %1892
        %1894 = vrot.lane.b32.xlu0 %v1819, 64
        %v1895 = vpop.permute.xlu0 %1894
        %1896 = vrot.lane.b32.xlu0 %v1820, 64
        %v1897 = vpop.permute.xlu0 %1896
        %1898 = vrot.lane.b32.xlu0 %v1821, 64
        %v1899 = vpop.permute.xlu0 %1898
        %1900 = vrot.lane.b32.xlu0 %v1822, 64
        %v1901 = vpop.permute.xlu0 %1900
        %1902 = vrot.lane.b32.xlu0 %v1823, 64
        %v1903 = vpop.permute.xlu0 %1902
        %1904 = vrot.lane.b32.xlu0 %v1824, 64
        %v1905 = vpop.permute.xlu0 %1904
        %1906 = vrot.lane.b32.xlu0 %v1825, 64
        %v1907 = vpop.permute.xlu0 %1906
        %1908 = vrot.lane.b32.xlu0 %v1826, 64
        %v1909 = vpop.permute.xlu0 %1908
        %1910 = vrot.lane.b32.xlu0 %v1827, 64
        %v1911 = vpop.permute.xlu0 %1910
        %1912 = vrot.lane.b32.xlu0 %v1828, 64
        %v1913 = vpop.permute.xlu0 %1912
        %1914 = vrot.lane.b32.xlu0 %v1829, 64
        %v1915 = vpop.permute.xlu0 %1914
        %1916 = vrot.lane.b32.xlu0 %v1830, 64
        %v1917 = vpop.permute.xlu0 %1916
        %1918 = vrot.lane.b32.xlu0 %v1831, 64
        %v1919 = vpop.permute.xlu0 %1918
        %1920 = vrot.lane.b32.xlu0 %v1832, 64
        %v1921 = vpop.permute.xlu0 %1920
        %1922 = vrot.lane.b32.xlu0 %v1833, 64
        %v1923 = vpop.permute.xlu0 %1922
        %1924 = vrot.lane.b32.xlu0 %v1834, 64
        %v1925 = vpop.permute.xlu0 %1924
        %1926 = vrot.lane.b32.xlu0 %v1835, 64
        %v1927 = vpop.permute.xlu0 %1926
        %1928 = vrot.lane.b32.xlu0 %v1836, 64
        %v1929 = vpop.permute.xlu0 %1928
        %1930 = vrot.lane.b32.xlu0 %v1837, 64
        %v1931 = vpop.permute.xlu0 %1930
        %1932 = vrot.lane.b32.xlu0 %v1838, 64
        %v1933 = vpop.permute.xlu0 %1932
        %1934 = vrot.lane.b32.xlu0 %v1839, 64
        %v1935 = vpop.permute.xlu0 %1934
        %vm1968 = vcmask 523264
        %v1969 = vsel %vm1968, %v989, %v1873
        %v1970 = vsel %vm1968, %v990, %v1875
        %v1971 = vsel %vm1968, %v991, %v1877
        %v1972 = vsel %vm1968, %v992, %v1879
        %v1973 = vsel %vm1968, %v993, %v1881
        %v1974 = vsel %vm1968, %v994, %v1883
        %v1975 = vsel %vm1968, %v995, %v1885
        %v1976 = vsel %vm1968, %v996, %v1887
        %v1977 = vsel %vm1968, %v997, %v1889
        %v1978 = vsel %vm1968, %v998, %v1891
        %v1979 = vsel %vm1968, %v999, %v1893
        %v1980 = vsel %vm1968, %v1000, %v1895
        %v1981 = vsel %vm1968, %v1001, %v1897
        %v1982 = vsel %vm1968, %v1002, %v1899
        %v1983 = vsel %vm1968, %v1003, %v1901
        %v1984 = vsel %vm1968, %v1004, %v1903
        %v1985 = vsel %vm1968, %v1005, %v1905
        %v1986 = vsel %vm1968, %v1006, %v1907
        %v1987 = vsel %vm1968, %v1007, %v1909
        %v1988 = vsel %vm1968, %v1008, %v1911
        %v1989 = vsel %vm1968, %v1009, %v1913
        %v1990 = vsel %vm1968, %v1010, %v1915
        %v1991 = vsel %vm1968, %v1011, %v1917
        %v1992 = vsel %vm1968, %v1012, %v1919
        %v1993 = vsel %vm1968, %v1013, %v1921
        %v1994 = vsel %vm1968, %v1014, %v1923
        %v1995 = vsel %vm1968, %v1015, %v1925
        %v1996 = vsel %vm1968, %v1016, %v1927
        %v1997 = vsel %vm1968, %v1017, %v1929
        %v1998 = vsel %vm1968, %v1018, %v1931
        %v1999 = vsel %vm1968, %v1019, %v1933
        %v2000 = vsel %vm1968, %v1020, %v1935
        %2001 = vst [vmem:[%s195] sm:$0xff] %v1969
        %2002 = vst [vmem:[%s195 + $0x8] sm:$0xff] %v1970
        %2003 = vst [vmem:[%s195 + $0x10] sm:$0xff] %v1971
        %2004 = vst [vmem:[%s195 + $0x18] sm:$0xff] %v1972
        %2005 = vst [vmem:[%s195 + $0x20] sm:$0xff] %v1973
        %2006 = vst [vmem:[%s195 + $0x28] sm:$0xff] %v1974
        %2007 = vst [vmem:[%s195 + $0x30] sm:$0xff] %v1975
        %2008 = vst [vmem:[%s195 + $0x38] sm:$0xff] %v1976
        %2009 = vst [vmem:[%s195 + $0x40] sm:$0xff] %v1977
        %2010 = vst [vmem:[%s195 + $0x48] sm:$0xff] %v1978
        %2011 = vst [vmem:[%s195 + $0x50] sm:$0xff] %v1979
        %2012 = vst [vmem:[%s195 + $0x58] sm:$0xff] %v1980
        %2013 = vst [vmem:[%s195 + $0x60] sm:$0xff] %v1981
        %2014 = vst [vmem:[%s195 + $0x68] sm:$0xff] %v1982
        %2015 = vst [vmem:[%s195 + $0x70] sm:$0xff] %v1983
        %2016 = vst [vmem:[%s195 + $0x78] sm:$0xff] %v1984
        %2017 = vst [vmem:[%s195 + $0x80] sm:$0xff] %v1985
        %2018 = vst [vmem:[%s195 + $0x88] sm:$0xff] %v1986
        %2019 = vst [vmem:[%s195 + $0x90] sm:$0xff] %v1987
        %2020 = vst [vmem:[%s195 + $0x98] sm:$0xff] %v1988
        %2021 = vst [vmem:[%s195 + $0xa0] sm:$0xff] %v1989
        %2022 = vst [vmem:[%s195 + $0xa8] sm:$0xff] %v1990
        %2023 = vst [vmem:[%s195 + $0xb0] sm:$0xff] %v1991
        %2024 = vst [vmem:[%s195 + $0xb8] sm:$0xff] %v1992
        %2025 = vst [vmem:[%s195 + $0xc0] sm:$0xff] %v1993
        %2026 = vst [vmem:[%s195 + $0xc8] sm:$0xff] %v1994
        %2027 = vst [vmem:[%s195 + $0xd0] sm:$0xff] %v1995
        %2028 = vst [vmem:[%s195 + $0xd8] sm:$0xff] %v1996
        %2029 = vst [vmem:[%s195 + $0xe0] sm:$0xff] %v1997
        %2030 = vst [vmem:[%s195 + $0xe8] sm:$0xff] %v1998
        %2031 = vst [vmem:[%s195 + $0xf0] sm:$0xff] %v1999
        %2032 = vst [vmem:[%s195 + $0xf8] sm:$0xff] %v2000
        %s2033 = sand.u32 %s95, 1
        %s2034 = scalar_lea.sflag [#allocation4], %s2033
        %s2035 = sand.u32 %s95, 1
        %s2036 = smul.addr %s2035, 256
        %s2037 = scalar_lea.vmem [#allocation5], %s2036
        // Predicated region
        $region33: #{tpu_custom_call.1} parent=27 // pred_check
          %p2038 = pneg %p105
        $region34: #{tpu_custom_call.1} parent=27 // pred_check_branch
          %2040 = sbr.rel (%p2038) target = $region36
        $region35: #{tpu_custom_call.1} parent=27 // pred_region
          %s2041 = smul.u32 32, %s24
          %s2043 = ssub.s32 4096, 4096
          %2044 = vsyncadd %s2034, %s2043
          %s2045 = smul.addr %s23, 32
          %s2046 = sadd.s32 %s2041, %s2045
          %s2047 = smul.addr %s2046, 128
          %s2048 = scalar_lea.hbm %s2, %s2047
          %s2049 = sshll.u32 %s2037, 4
          %s2050 = int_to_ptr.vmem [resolvable:$true] %s2049
          %2055 = dma.vmem_to_hbm [thread:$0]  %s2050, 4096, %s2048, %s2034, 128, 128, 8
        $region36: #{tpu_custom_call.1} parent=27 // pred_fallthru
          _
      $region28: #{tpu_custom_call.1} parent=5 // pred_fallthru
        _
      %p2056 = scmp.le.s32.totalorder 2, %s14
      // Predicated region
      $region37: #{tpu_custom_call.1} parent=5 // pred_check
        %p2057 = pneg %p2056
      $region38: #{tpu_custom_call.1} parent=5 // pred_check_branch
        %2059 = sbr.rel (%p2057) target = $region40
      $region39: #{tpu_custom_call.1} parent=5 // pred_region
        %s2060 = ssub.s32 %s14, 2
        // Predicated region
        $region41: #{tpu_custom_call.1} parent=39 // pred_check
          %p2061 = pneg %p111
        $region42: #{tpu_custom_call.1} parent=39 // pred_check_branch
          %2063 = sbr.rel (%p2061) target = $region44
        $region43: #{tpu_custom_call.1} parent=39 // pred_region
          %s2064 = sand.u32 %s96, 1
          %s2065 = scalar_lea.sflag [#allocation4], %s2064
          %s2066 = sand.u32 %s96, 1
          %s2067 = smul.addr %s2066, 256
          %s2068 = scalar_lea.vmem [#allocation5], %s2067
          %2069 = dma.done %s2065, 4096
        $region44: #{tpu_custom_call.1} parent=39 // pred_fallthru
          _
      $region40: #{tpu_custom_call.1} parent=5 // pred_fallthru
        _
    $region6: #{tpu_custom_call.1} parent=1 // loop_footer
      %s18 = sadd.s32 1, %s14
    $region7: #{tpu_custom_call.1} parent=1 // loop_footer_branch
      %13 = sbr.rel target = $region3
    $region8: #{tpu_custom_call.1} parent=1 // loop_exit
      _
    %2070 = vsyncpa [#allocation3], 1
    %s2071 = scalar_lea.sflag [#allocation3], 1
    %2072 = vsyncpa %s2071, 1
    %2073 = vsyncpa [#allocation4], 1
    %s2074 = scalar_lea.sflag [#allocation4], 1
    %2075 = vsyncpa %s2074, 1

</llo_original>
